<compile_context>
chip_gen: v7x
topology: tpu7x:2x2x1
jax: 0.10.0
libtpu: 0.0.40
codegen_flags: <defaults>
</compile_context>

<pallas_src>
import numpy as np

import jax
import jax.numpy as jnp
from jax.experimental import pallas as pl
from jax.experimental.pallas import tpu as pltpu


# ----------------------------------------------------------------------------
# Fused LeNet5 kernel: everything is a batched 2-D matmul + elementwise epilogue.
# ----------------------------------------------------------------------------
def _lenet5_kernel(l1_ref, m1_ref, b1_ref, sel1_ref, m2_ref, b2_ref,
                   sel2_ref, wfc1_ref, bfc1_ref, wfc2_ref, bfc2_ref,
                   wfc3_ref, bfc3_ref, o_ref):
    f32 = jnp.float32

    def mm(a, w_bf16):                  # f32 activation -> bf16 at the dot, f32 acc
        return jnp.dot(a.astype(jnp.bfloat16), w_bf16, preferred_element_type=f32)

    def pool(sel, a):                   # {0, 0.5} row pool / band select, all f32
        return jnp.dot(sel, a, preferred_element_type=f32)

    # conv1 + bias + tanh over the whole batch tile: (Bt*24, 140) @ (140, 144).
    t1 = jnp.tanh(mm(l1_ref[...], m1_ref[...]) + b1_ref[...])

    # pool1(rows) + conv2 (pool1's lane/channel pool folded into m2f):
    # a2 = sum_kh (SEL1[kh] @ t1) @ m2f[kh]   -- all batched across the tile.
    a2 = mm(pool(sel1_ref[0], t1), m2_ref[0])
    for kh in range(1, 5):
        a2 = a2 + mm(pool(sel1_ref[kh], t1), m2_ref[kh])
    t2 = jnp.tanh(a2 + b2_ref[...])                       # (Bt*8, 128)

    # pool2(rows) + fc1 (pool2's lane pool + torch flatten order folded into wfc1f):
    # y = sum_r (SEL2[r] @ t2) @ wfc1f[r]     -- batched (Bt, 128) result.
    y = mm(pool(sel2_ref[0], t2), wfc1_ref[0])
    for r in range(1, 4):
        y = y + mm(pool(sel2_ref[r], t2), wfc1_ref[r])
    y = jnp.tanh(y + bfc1_ref[...])

    # fc2 (+tanh), fc3 -- batched (Bt, 128) x (128, 128), zero-padded lanes.
    y = jnp.tanh(mm(y, wfc2_ref[...]) + bfc2_ref[...])
    y = mm(y, wfc3_ref[...]) + bfc3_ref[...]

    o_ref[...] = y.astype(o_ref.dtype)                    # one dense (Bt, 128) store


# ----------------------------------------------------------------------------
# One-time host-side weight repacking (numpy; all folds done in f32).
# ----------------------------------------------------------------------------
def pack_params(params):
    f32 = np.float32
    w1 = np.asarray(params["w1"], f32)        # (6, 1, 5, 5)
    b1 = np.asarray(params["b1"], f32)
    w2 = np.asarray(params["w2"], f32)        # (16, 6, 5, 5)
    b2 = np.asarray(params["b2"], f32)
    fc1_w = np.asarray(params["fc1_w"], f32)  # (120, 256)
    fc1_b = np.asarray(params["fc1_b"], f32)
    fc2_w = np.asarray(params["fc2_w"], f32)  # (84, 120)
    fc2_b = np.asarray(params["fc2_b"], f32)
    fc3_w = np.asarray(params["fc3_w"], f32)  # (10, 84)
    fc3_b = np.asarray(params["fc3_b"], f32)

    C1, C2, K = 6, 16, 5
    OW1, PW1, OW2, PW2, PH2 = 24, 12, 8, 4, 4

    # conv1: K-concatenated band matrix. m1cat[kh*28 + w, ow*6 + co] = w1[co,0,kh,w-ow]
    m1cat = np.zeros((K * 28, OW1 * C1), f32)             # (140, 144)
    for kh in range(K):
        for kw in range(K):
            for ow in range(OW1):
                m1cat[kh * 28 + ow + kw, ow * C1:(ow + 1) * C1] = w1[:, 0, kh, kw]
    b1t = np.tile(b1, OW1)[None, :]                       # (1, 144)

    # conv2 band matrices with pool1's lane/channel 2-avg folded in (f32 fold).
    m2 = np.zeros((K, PW1 * C1, OW2 * C2), f32)           # (5, 72, 128)
    for kh in range(K):
        for kw in range(K):
            for ow in range(OW2):
                for ci in range(C1):
                    m2[kh, (ow + kw) * C1 + ci, ow * C2:(ow + 1) * C2] = w2[:, ci, kh, kw]
    cp1 = np.zeros((OW1 * C1, PW1 * C1), f32)             # (144, 72)
    for j in range(PW1):
        for ch in range(C1):
            cp1[(2 * j) * C1 + ch, j * C1 + ch] = 0.5
            cp1[(2 * j + 1) * C1 + ch, j * C1 + ch] = 0.5
    m2f = np.einsum("il,kln->kin", cp1, m2)               # (5, 144, 128)
    b2t = np.tile(b2, OW2)[None, :]                       # (1, 128)

    # fc1 with torch .view(-1, 256) flatten order and pool2's lane pool folded in.
    wfc1 = np.zeros((PH2, PW2 * C2, 128), f32)            # (4, 64, 128)
    for r in range(PH2):
        for ow in range(PW2):
            for co in range(C2):
                wfc1[r, ow * C2 + co, :120] = fc1_w[:, co * (PH2 * PW2) + r * PW2 + ow]
    cp2 = np.zeros((OW2 * C2, PW2 * C2), f32)             # (128, 64)
    for j in range(PW2):
        for ch in range(C2):
            cp2[(2 * j) * C2 + ch, j * C2 + ch] = 0.5
            cp2[(2 * j + 1) * C2 + ch, j * C2 + ch] = 0.5
    wfc1f = np.einsum("il,rln->rin", cp2, wfc1)           # (4, 128, 128)
    bfc1 = np.zeros((1, 128), f32); bfc1[0, :120] = fc1_b

    wfc2 = np.zeros((128, 128), f32); wfc2[:120, :84] = fc2_w.T
    bfc2 = np.zeros((1, 128), f32); bfc2[0, :84] = fc2_b
    wfc3 = np.zeros((128, 128), f32); wfc3[:84, :10] = fc3_w.T
    bfc3 = np.zeros((1, 128), f32); bfc3[0, :10] = fc3_b

    bf = lambda a: jnp.asarray(a, jnp.bfloat16)
    fp = lambda a: jnp.asarray(a, jnp.float32)
    return {
        "m1cat": bf(m1cat), "b1": fp(b1t),
        "m2f": bf(m2f), "b2": fp(b2t),
        "wfc1f": bf(wfc1f), "bfc1": fp(bfc1),
        "wfc2": bf(wfc2), "bfc2": fp(bfc2),
        "wfc3": bf(wfc3), "bfc3": fp(bfc3),
    }


def _pool_select_mats(bt):
    """Batched row-pool + band-select matrices (depend only on the static tile)."""
    f32 = np.float32
    sel1 = np.zeros((5, bt * 8, bt * 24), f32)   # conv2 band taps over row-pooled t1
    for kh in range(5):
        for b in range(bt):
            for oh2 in range(8):
                r = 2 * (oh2 + kh)
                sel1[kh, b * 8 + oh2, b * 24 + r] = 0.5
                sel1[kh, b * 8 + oh2, b * 24 + r + 1] = 0.5
    sel2 = np.zeros((4, bt, bt * 8), f32)        # pool2 row pairs per image
    for r in range(4):
        for b in range(bt):
            sel2[r, b, b * 8 + 2 * r] = 0.5
            sel2[r, b, b * 8 + 2 * r + 1] = 0.5
    return jnp.asarray(sel1, jnp.float32), jnp.asarray(sel2, jnp.float32)


# ----------------------------------------------------------------------------
# Forward wrapper: one pallas_call, batch grid, weights VMEM-resident.
# ----------------------------------------------------------------------------
def lenet5_forward(x, packed, *, batch_tile=8):
    B, C, H, W = x.shape
    assert (C, H, W) == (1, 28, 28), "LeNet5 (fc1=16*4*4) implies 1x28x28 input"

    # Batch tiling: whole batch in one step if small, else multiple-of-8 tiles.
    if B <= batch_tile:
        bt, bp = B, B
    else:
        bt = batch_tile
        bp = ((B + bt - 1) // bt) * bt

    x2 = x.reshape(B, H, W).astype(jnp.float32)
    if bp != B:
        x2 = jnp.concatenate([x2, jnp.zeros((bp - B, H, W), jnp.float32)], axis=0)

    # K-concatenated conv1 LHS (layout plumbing in the wrapper, no in-kernel slices):
    # l1[b*24 + oh, kh*28 + w] = x[b, oh + kh, w]
    l1 = jnp.concatenate([x2[:, kh:kh + 24, :] for kh in range(5)], axis=-1)
    l1 = l1.reshape(bp * 24, 5 * 28)

    sel1, sel2 = _pool_select_mats(bt)

    operands = [l1, packed["m1cat"], packed["b1"], sel1, packed["m2f"],
                packed["b2"], sel2, packed["wfc1f"], packed["bfc1"],
                packed["wfc2"], packed["bfc2"], packed["wfc3"], packed["bfc3"]]

    def const(*shape):   # weight block: constant index_map -> DMA'd once, VMEM resident
        return pl.BlockSpec(shape, lambda i, _s=len(shape): (0,) * _s)

    in_specs = [
        pl.BlockSpec((bt * 24, 140), lambda i: (i, 0)),   # batched conv1 LHS tile
        const(140, 144), const(1, 144),
        const(5, bt * 8, bt * 24),
        const(5, 144, 128), const(1, 128),
        const(4, bt, bt * 8),
        const(4, 128, 128), const(1, 128),
        const(128, 128), const(1, 128),
        const(128, 128), const(1, 128),
    ]

    out = pl.pallas_call(
        _lenet5_kernel,
        out_shape=jax.ShapeDtypeStruct((bp, 128), jnp.float32),
        grid=(bp // bt,),
        in_specs=in_specs,
        out_specs=pl.BlockSpec((bt, 128), lambda i: (i, 0)),
        compiler_params=pltpu.CompilerParams(
            dimension_semantics=("parallel",)),
    )(*operands)
    return out[:B, :10]                         # drop lane/batch padding outside


# ----------------------------------------------------------------------------
# Pure-JAX reference for a sanity check
# ----------------------------------------------------------------------------
def _ref_pool(x):
    B, C, H, W = x.shape
    return x.reshape(B, C, H // 2, 2, W // 2, 2).mean(axis=(3, 5))


def ref_forward(x, params):
    dn = ("NCHW", "OIHW", "NCHW")
    y = jax.lax.conv_general_dilated(
        x, params["w1"], (1, 1), "VALID", dimension_numbers=dn,
        precision=jax.lax.Precision.HIGHEST) + params["b1"][None, :, None, None]
    y = _ref_pool(jnp.tanh(y))
    y = jax.lax.conv_general_dilated(
        y, params["w2"], (1, 1), "VALID", dimension_numbers=dn,
        precision=jax.lax.Precision.HIGHEST) + params["b2"][None, :, None, None]
    y = _ref_pool(jnp.tanh(y))
    y = y.reshape(x.shape[0], 16 * 4 * 4)
    y = jnp.tanh(y @ params["fc1_w"].T + params["fc1_b"])
    y = jnp.tanh(y @ params["fc2_w"].T + params["fc2_b"])
    y = y @ params["fc3_w"].T + params["fc3_b"]
    return y


def init_params(key):
    ks = jax.random.split(key, 10)
    f32 = jnp.float32
    return {
        "w1": 0.2 * jax.random.normal(ks[0], (6, 1, 5, 5), f32),
        "b1": 0.1 * jax.random.normal(ks[1], (6,), f32),
        "w2": 0.1 * jax.random.normal(ks[2], (16, 6, 5, 5), f32),
        "b2": 0.1 * jax.random.normal(ks[3], (16,), f32),
        "fc1_w": 0.05 * jax.random.normal(ks[4], (120, 256), f32),
        "fc1_b": 0.1 * jax.random.normal(ks[5], (120,), f32),
        "fc2_w": 0.1 * jax.random.normal(ks[6], (84, 120), f32),
        "fc2_b": 0.1 * jax.random.normal(ks[7], (84,), f32),
        "fc3_w": 0.1 * jax.random.normal(ks[8], (10, 84), f32),
        "fc3_b": 0.1 * jax.random.normal(ks[9], (10,), f32),
    }


if __name__ == "__main__":
    key = jax.random.PRNGKey(0)
    pkey, xkey = jax.random.split(key)
    params = init_params(pkey)
    packed = pack_params(params)          # one-time host-side weight repacking

    # LeNet5's fc1 (16*4*4 inputs) implies 1x28x28 inputs; batch=2 keeps it small.
    x = jax.random.normal(xkey, (2, 1, 28, 28), jnp.float32)

    fwd = jax.jit(lenet5_forward)
    out = jax.block_until_ready(fwd(x, packed))
    assert out.shape == (2, 10) and out.dtype == jnp.float32

    ref = ref_forward(x, params)
    max_diff = float(jnp.max(jnp.abs(out - ref)))
    # bf16 MXU weight operands (f32 activations/accumulation/pooling) -> loose tol.
    assert max_diff < 5e-2, f"mismatch vs reference: max_diff={max_diff}"

    print("KERNEL_OK")
</pallas_src>

<mosaic_0001>
module attributes {stable_mosaic.version = 11 : i64} {
  func.func @_lenet5_kernel(%arg0: i32, %arg1: memref<48x140xf32, #tpu.memory_space<vmem>>, %arg2: memref<140x144xbf16, #tpu.memory_space<vmem>>, %arg3: memref<1x144xf32, #tpu.memory_space<vmem>>, %arg4: memref<5x16x48xf32, #tpu.memory_space<vmem>>, %arg5: memref<5x144x128xbf16, #tpu.memory_space<vmem>>, %arg6: memref<1x128xf32, #tpu.memory_space<vmem>>, %arg7: memref<4x2x16xf32, #tpu.memory_space<vmem>>, %arg8: memref<4x128x128xbf16, #tpu.memory_space<vmem>>, %arg9: memref<1x128xf32, #tpu.memory_space<vmem>>, %arg10: memref<128x128xbf16, #tpu.memory_space<vmem>>, %arg11: memref<1x128xf32, #tpu.memory_space<vmem>>, %arg12: memref<128x128xbf16, #tpu.memory_space<vmem>>, %arg13: memref<1x128xf32, #tpu.memory_space<vmem>>, %arg14: memref<2x128xf32, #tpu.memory_space<vmem>>) attributes {dimension_semantics = [#tpu.dimension_semantics<parallel>], iteration_bounds = array<i64: 1>, scalar_prefetch = 0 : i64, scratch_operands = 0 : i64, tpu.core_type = #tpu.core_type<tc>, window_params = [{transform_indices = @transform_0, window_bounds = array<i64: 48, 140>}, {pipeline_mode = #tpu.pipeline_mode<synchronous>, transform_indices = @transform_1, window_bounds = array<i64: 140, 144>}, {pipeline_mode = #tpu.pipeline_mode<synchronous>, transform_indices = @transform_2, window_bounds = array<i64: 1, 144>}, {pipeline_mode = #tpu.pipeline_mode<synchronous>, transform_indices = @transform_3, window_bounds = array<i64: 5, 16, 48>}, {pipeline_mode = #tpu.pipeline_mode<synchronous>, transform_indices = @transform_4, window_bounds = array<i64: 5, 144, 128>}, {pipeline_mode = #tpu.pipeline_mode<synchronous>, transform_indices = @transform_5, window_bounds = array<i64: 1, 128>}, {pipeline_mode = #tpu.pipeline_mode<synchronous>, transform_indices = @transform_6, window_bounds = array<i64: 4, 2, 16>}, {pipeline_mode = #tpu.pipeline_mode<synchronous>, transform_indices = @transform_7, window_bounds = array<i64: 4, 128, 128>}, {pipeline_mode = #tpu.pipeline_mode<synchronous>, transform_indices = @transform_8, window_bounds = array<i64: 1, 128>}, {pipeline_mode = #tpu.pipeline_mode<synchronous>, transform_indices = @transform_9, window_bounds = array<i64: 128, 128>}, {pipeline_mode = #tpu.pipeline_mode<synchronous>, transform_indices = @transform_10, window_bounds = array<i64: 1, 128>}, {pipeline_mode = #tpu.pipeline_mode<synchronous>, transform_indices = @transform_11, window_bounds = array<i64: 128, 128>}, {pipeline_mode = #tpu.pipeline_mode<synchronous>, transform_indices = @transform_12, window_bounds = array<i64: 1, 128>}, {transform_indices = @transform_13, window_bounds = array<i64: 2, 128>}]} {
    %c0 = arith.constant 0 : index
    %c0_0 = arith.constant 0 : index
    %0 = vector.load %arg1[%c0, %c0_0] : memref<48x140xf32, #tpu.memory_space<vmem>>, vector<48x140xf32>
    %c0_1 = arith.constant 0 : index
    %c0_2 = arith.constant 0 : index
    %1 = vector.load %arg2[%c0_1, %c0_2] : memref<140x144xbf16, #tpu.memory_space<vmem>>, vector<140x144xbf16>
    %2 = arith.truncf %0 : vector<48x140xf32> to vector<48x140xbf16>
    %cst = arith.constant dense<0.000000e+00> : vector<48x144xf32>
    %3 = tpu.matmul %2, %1, %cst {dimension_numbers = #tpu.dot_dimension_numbers<[1], [0], [0], [1], [0, 0, 1, 1], [], []>} : vector<48x140xbf16>, vector<140x144xbf16>, vector<48x144xf32> -> vector<48x144xf32>
    %c0_3 = arith.constant 0 : index
    %c0_4 = arith.constant 0 : index
    %4 = vector.load %arg3[%c0_3, %c0_4] : memref<1x144xf32, #tpu.memory_space<vmem>>, vector<1x144xf32>
    %5 = vector.broadcast %4 : vector<1x144xf32> to vector<48x144xf32>
    %6 = arith.addf %3, %5 : vector<48x144xf32>
    %7 = math.tanh %6 : vector<48x144xf32>
    %c0_5 = arith.constant 0 : index
    %c0_6 = arith.constant 0 : index
    %c0_7 = arith.constant 0 : index
    %8 = vector.load %arg4[%c0_5, %c0_6, %c0_7] : memref<5x16x48xf32, #tpu.memory_space<vmem>>, vector<1x16x48xf32>
    %9 = vector.shape_cast %8 : vector<1x16x48xf32> to vector<16x48xf32>
    %cst_8 = arith.constant dense<0.000000e+00> : vector<16x144xf32>
    %10 = tpu.matmul %9, %7, %cst_8 {dimension_numbers = #tpu.dot_dimension_numbers<[1], [0], [0], [1], [0, 0, 1, 1], [], []>} : vector<16x48xf32>, vector<48x144xf32>, vector<16x144xf32> -> vector<16x144xf32>
    %c0_9 = arith.constant 0 : index
    %c0_10 = arith.constant 0 : index
    %c0_11 = arith.constant 0 : index
    %11 = vector.load %arg5[%c0_9, %c0_10, %c0_11] : memref<5x144x128xbf16, #tpu.memory_space<vmem>>, vector<1x144x128xbf16>
    %12 = vector.shape_cast %11 : vector<1x144x128xbf16> to vector<144x128xbf16>
    %13 = arith.truncf %10 : vector<16x144xf32> to vector<16x144xbf16>
    %cst_12 = arith.constant dense<0.000000e+00> : vector<16x128xf32>
    %14 = tpu.matmul %13, %12, %cst_12 {dimension_numbers = #tpu.dot_dimension_numbers<[1], [0], [0], [1], [0, 0, 1, 1], [], []>} : vector<16x144xbf16>, vector<144x128xbf16>, vector<16x128xf32> -> vector<16x128xf32>
    %c1 = arith.constant 1 : index
    %c0_13 = arith.constant 0 : index
    %c0_14 = arith.constant 0 : index
    %15 = vector.load %arg4[%c1, %c0_13, %c0_14] : memref<5x16x48xf32, #tpu.memory_space<vmem>>, vector<1x16x48xf32>
    %16 = vector.shape_cast %15 : vector<1x16x48xf32> to vector<16x48xf32>
    %cst_15 = arith.constant dense<0.000000e+00> : vector<16x144xf32>
    %17 = tpu.matmul %16, %7, %cst_15 {dimension_numbers = #tpu.dot_dimension_numbers<[1], [0], [0], [1], [0, 0, 1, 1], [], []>} : vector<16x48xf32>, vector<48x144xf32>, vector<16x144xf32> -> vector<16x144xf32>
    %c1_16 = arith.constant 1 : index
    %c0_17 = arith.constant 0 : index
    %c0_18 = arith.constant 0 : index
    %18 = vector.load %arg5[%c1_16, %c0_17, %c0_18] : memref<5x144x128xbf16, #tpu.memory_space<vmem>>, vector<1x144x128xbf16>
    %19 = vector.shape_cast %18 : vector<1x144x128xbf16> to vector<144x128xbf16>
    %20 = arith.truncf %17 : vector<16x144xf32> to vector<16x144xbf16>
    %cst_19 = arith.constant dense<0.000000e+00> : vector<16x128xf32>
    %21 = tpu.matmul %20, %19, %cst_19 {dimension_numbers = #tpu.dot_dimension_numbers<[1], [0], [0], [1], [0, 0, 1, 1], [], []>} : vector<16x144xbf16>, vector<144x128xbf16>, vector<16x128xf32> -> vector<16x128xf32>
    %22 = arith.addf %14, %21 : vector<16x128xf32>
    %c2 = arith.constant 2 : index
    %c0_20 = arith.constant 0 : index
    %c0_21 = arith.constant 0 : index
    %23 = vector.load %arg4[%c2, %c0_20, %c0_21] : memref<5x16x48xf32, #tpu.memory_space<vmem>>, vector<1x16x48xf32>
    %24 = vector.shape_cast %23 : vector<1x16x48xf32> to vector<16x48xf32>
    %cst_22 = arith.constant dense<0.000000e+00> : vector<16x144xf32>
    %25 = tpu.matmul %24, %7, %cst_22 {dimension_numbers = #tpu.dot_dimension_numbers<[1], [0], [0], [1], [0, 0, 1, 1], [], []>} : vector<16x48xf32>, vector<48x144xf32>, vector<16x144xf32> -> vector<16x144xf32>
    %c2_23 = arith.constant 2 : index
    %c0_24 = arith.constant 0 : index
    %c0_25 = arith.constant 0 : index
    %26 = vector.load %arg5[%c2_23, %c0_24, %c0_25] : memref<5x144x128xbf16, #tpu.memory_space<vmem>>, vector<1x144x128xbf16>
    %27 = vector.shape_cast %26 : vector<1x144x128xbf16> to vector<144x128xbf16>
    %28 = arith.truncf %25 : vector<16x144xf32> to vector<16x144xbf16>
    %cst_26 = arith.constant dense<0.000000e+00> : vector<16x128xf32>
    %29 = tpu.matmul %28, %27, %cst_26 {dimension_numbers = #tpu.dot_dimension_numbers<[1], [0], [0], [1], [0, 0, 1, 1], [], []>} : vector<16x144xbf16>, vector<144x128xbf16>, vector<16x128xf32> -> vector<16x128xf32>
    %30 = arith.addf %22, %29 : vector<16x128xf32>
    %c3 = arith.constant 3 : index
    %c0_27 = arith.constant 0 : index
    %c0_28 = arith.constant 0 : index
    %31 = vector.load %arg4[%c3, %c0_27, %c0_28] : memref<5x16x48xf32, #tpu.memory_space<vmem>>, vector<1x16x48xf32>
    %32 = vector.shape_cast %31 : vector<1x16x48xf32> to vector<16x48xf32>
    %cst_29 = arith.constant dense<0.000000e+00> : vector<16x144xf32>
    %33 = tpu.matmul %32, %7, %cst_29 {dimension_numbers = #tpu.dot_dimension_numbers<[1], [0], [0], [1], [0, 0, 1, 1], [], []>} : vector<16x48xf32>, vector<48x144xf32>, vector<16x144xf32> -> vector<16x144xf32>
    %c3_30 = arith.constant 3 : index
    %c0_31 = arith.constant 0 : index
    %c0_32 = arith.constant 0 : index
    %34 = vector.load %arg5[%c3_30, %c0_31, %c0_32] : memref<5x144x128xbf16, #tpu.memory_space<vmem>>, vector<1x144x128xbf16>
    %35 = vector.shape_cast %34 : vector<1x144x128xbf16> to vector<144x128xbf16>
    %36 = arith.truncf %33 : vector<16x144xf32> to vector<16x144xbf16>
    %cst_33 = arith.constant dense<0.000000e+00> : vector<16x128xf32>
    %37 = tpu.matmul %36, %35, %cst_33 {dimension_numbers = #tpu.dot_dimension_numbers<[1], [0], [0], [1], [0, 0, 1, 1], [], []>} : vector<16x144xbf16>, vector<144x128xbf16>, vector<16x128xf32> -> vector<16x128xf32>
    %38 = arith.addf %30, %37 : vector<16x128xf32>
    %c4 = arith.constant 4 : index
    %c0_34 = arith.constant 0 : index
    %c0_35 = arith.constant 0 : index
    %39 = vector.load %arg4[%c4, %c0_34, %c0_35] : memref<5x16x48xf32, #tpu.memory_space<vmem>>, vector<1x16x48xf32>
    %40 = vector.shape_cast %39 : vector<1x16x48xf32> to vector<16x48xf32>
    %cst_36 = arith.constant dense<0.000000e+00> : vector<16x144xf32>
    %41 = tpu.matmul %40, %7, %cst_36 {dimension_numbers = #tpu.dot_dimension_numbers<[1], [0], [0], [1], [0, 0, 1, 1], [], []>} : vector<16x48xf32>, vector<48x144xf32>, vector<16x144xf32> -> vector<16x144xf32>
    %c4_37 = arith.constant 4 : index
    %c0_38 = arith.constant 0 : index
    %c0_39 = arith.constant 0 : index
    %42 = vector.load %arg5[%c4_37, %c0_38, %c0_39] : memref<5x144x128xbf16, #tpu.memory_space<vmem>>, vector<1x144x128xbf16>
    %43 = vector.shape_cast %42 : vector<1x144x128xbf16> to vector<144x128xbf16>
    %44 = arith.truncf %41 : vector<16x144xf32> to vector<16x144xbf16>
    %cst_40 = arith.constant dense<0.000000e+00> : vector<16x128xf32>
    %45 = tpu.matmul %44, %43, %cst_40 {dimension_numbers = #tpu.dot_dimension_numbers<[1], [0], [0], [1], [0, 0, 1, 1], [], []>} : vector<16x144xbf16>, vector<144x128xbf16>, vector<16x128xf32> -> vector<16x128xf32>
    %46 = arith.addf %38, %45 : vector<16x128xf32>
    %c0_41 = arith.constant 0 : index
    %c0_42 = arith.constant 0 : index
    %47 = vector.load %arg6[%c0_41, %c0_42] : memref<1x128xf32, #tpu.memory_space<vmem>>, vector<1x128xf32>
    %48 = vector.broadcast %47 : vector<1x128xf32> to vector<16x128xf32>
    %49 = arith.addf %46, %48 : vector<16x128xf32>
    %50 = math.tanh %49 : vector<16x128xf32>
    %c0_43 = arith.constant 0 : index
    %c0_44 = arith.constant 0 : index
    %c0_45 = arith.constant 0 : index
    %51 = vector.load %arg7[%c0_43, %c0_44, %c0_45] : memref<4x2x16xf32, #tpu.memory_space<vmem>>, vector<1x2x16xf32>
    %52 = vector.shape_cast %51 : vector<1x2x16xf32> to vector<2x16xf32>
    %cst_46 = arith.constant dense<0.000000e+00> : vector<2x128xf32>
    %53 = tpu.matmul %52, %50, %cst_46 {dimension_numbers = #tpu.dot_dimension_numbers<[1], [0], [0], [1], [0, 0, 1, 1], [], []>} : vector<2x16xf32>, vector<16x128xf32>, vector<2x128xf32> -> vector<2x128xf32>
    %c0_47 = arith.constant 0 : index
    %c0_48 = arith.constant 0 : index
    %c0_49 = arith.constant 0 : index
    %54 = vector.load %arg8[%c0_47, %c0_48, %c0_49] : memref<4x128x128xbf16, #tpu.memory_space<vmem>>, vector<1x128x128xbf16>
    %55 = vector.shape_cast %54 : vector<1x128x128xbf16> to vector<128x128xbf16>
    %56 = arith.truncf %53 : vector<2x128xf32> to vector<2x128xbf16>
    %cst_50 = arith.constant dense<0.000000e+00> : vector<2x128xf32>
    %57 = tpu.matmul %56, %55, %cst_50 {dimension_numbers = #tpu.dot_dimension_numbers<[1], [0], [0], [1], [0, 0, 1, 1], [], []>} : vector<2x128xbf16>, vector<128x128xbf16>, vector<2x128xf32> -> vector<2x128xf32>
    %c1_51 = arith.constant 1 : index
    %c0_52 = arith.constant 0 : index
    %c0_53 = arith.constant 0 : index
    %58 = vector.load %arg7[%c1_51, %c0_52, %c0_53] : memref<4x2x16xf32, #tpu.memory_space<vmem>>, vector<1x2x16xf32>
    %59 = vector.shape_cast %58 : vector<1x2x16xf32> to vector<2x16xf32>
    %cst_54 = arith.constant dense<0.000000e+00> : vector<2x128xf32>
    %60 = tpu.matmul %59, %50, %cst_54 {dimension_numbers = #tpu.dot_dimension_numbers<[1], [0], [0], [1], [0, 0, 1, 1], [], []>} : vector<2x16xf32>, vector<16x128xf32>, vector<2x128xf32> -> vector<2x128xf32>
    %c1_55 = arith.constant 1 : index
    %c0_56 = arith.constant 0 : index
    %c0_57 = arith.constant 0 : index
    %61 = vector.load %arg8[%c1_55, %c0_56, %c0_57] : memref<4x128x128xbf16, #tpu.memory_space<vmem>>, vector<1x128x128xbf16>
    %62 = vector.shape_cast %61 : vector<1x128x128xbf16> to vector<128x128xbf16>
    %63 = arith.truncf %60 : vector<2x128xf32> to vector<2x128xbf16>
    %cst_58 = arith.constant dense<0.000000e+00> : vector<2x128xf32>
    %64 = tpu.matmul %63, %62, %cst_58 {dimension_numbers = #tpu.dot_dimension_numbers<[1], [0], [0], [1], [0, 0, 1, 1], [], []>} : vector<2x128xbf16>, vector<128x128xbf16>, vector<2x128xf32> -> vector<2x128xf32>
    %65 = arith.addf %57, %64 : vector<2x128xf32>
    %c2_59 = arith.constant 2 : index
    %c0_60 = arith.constant 0 : index
    %c0_61 = arith.constant 0 : index
    %66 = vector.load %arg7[%c2_59, %c0_60, %c0_61] : memref<4x2x16xf32, #tpu.memory_space<vmem>>, vector<1x2x16xf32>
    %67 = vector.shape_cast %66 : vector<1x2x16xf32> to vector<2x16xf32>
    %cst_62 = arith.constant dense<0.000000e+00> : vector<2x128xf32>
    %68 = tpu.matmul %67, %50, %cst_62 {dimension_numbers = #tpu.dot_dimension_numbers<[1], [0], [0], [1], [0, 0, 1, 1], [], []>} : vector<2x16xf32>, vector<16x128xf32>, vector<2x128xf32> -> vector<2x128xf32>
    %c2_63 = arith.constant 2 : index
    %c0_64 = arith.constant 0 : index
    %c0_65 = arith.constant 0 : index
    %69 = vector.load %arg8[%c2_63, %c0_64, %c0_65] : memref<4x128x128xbf16, #tpu.memory_space<vmem>>, vector<1x128x128xbf16>
    %70 = vector.shape_cast %69 : vector<1x128x128xbf16> to vector<128x128xbf16>
    %71 = arith.truncf %68 : vector<2x128xf32> to vector<2x128xbf16>
    %cst_66 = arith.constant dense<0.000000e+00> : vector<2x128xf32>
    %72 = tpu.matmul %71, %70, %cst_66 {dimension_numbers = #tpu.dot_dimension_numbers<[1], [0], [0], [1], [0, 0, 1, 1], [], []>} : vector<2x128xbf16>, vector<128x128xbf16>, vector<2x128xf32> -> vector<2x128xf32>
    %73 = arith.addf %65, %72 : vector<2x128xf32>
    %c3_67 = arith.constant 3 : index
    %c0_68 = arith.constant 0 : index
    %c0_69 = arith.constant 0 : index
    %74 = vector.load %arg7[%c3_67, %c0_68, %c0_69] : memref<4x2x16xf32, #tpu.memory_space<vmem>>, vector<1x2x16xf32>
    %75 = vector.shape_cast %74 : vector<1x2x16xf32> to vector<2x16xf32>
    %cst_70 = arith.constant dense<0.000000e+00> : vector<2x128xf32>
    %76 = tpu.matmul %75, %50, %cst_70 {dimension_numbers = #tpu.dot_dimension_numbers<[1], [0], [0], [1], [0, 0, 1, 1], [], []>} : vector<2x16xf32>, vector<16x128xf32>, vector<2x128xf32> -> vector<2x128xf32>
    %c3_71 = arith.constant 3 : index
    %c0_72 = arith.constant 0 : index
    %c0_73 = arith.constant 0 : index
    %77 = vector.load %arg8[%c3_71, %c0_72, %c0_73] : memref<4x128x128xbf16, #tpu.memory_space<vmem>>, vector<1x128x128xbf16>
    %78 = vector.shape_cast %77 : vector<1x128x128xbf16> to vector<128x128xbf16>
    %79 = arith.truncf %76 : vector<2x128xf32> to vector<2x128xbf16>
    %cst_74 = arith.constant dense<0.000000e+00> : vector<2x128xf32>
    %80 = tpu.matmul %79, %78, %cst_74 {dimension_numbers = #tpu.dot_dimension_numbers<[1], [0], [0], [1], [0, 0, 1, 1], [], []>} : vector<2x128xbf16>, vector<128x128xbf16>, vector<2x128xf32> -> vector<2x128xf32>
    %81 = arith.addf %73, %80 : vector<2x128xf32>
    %c0_75 = arith.constant 0 : index
    %c0_76 = arith.constant 0 : index
    %82 = vector.load %arg9[%c0_75, %c0_76] : memref<1x128xf32, #tpu.memory_space<vmem>>, vector<1x128xf32>
    %83 = vector.broadcast %82 : vector<1x128xf32> to vector<2x128xf32>
    %84 = arith.addf %81, %83 : vector<2x128xf32>
    %85 = math.tanh %84 : vector<2x128xf32>
    %c0_77 = arith.constant 0 : index
    %c0_78 = arith.constant 0 : index
    %86 = vector.load %arg10[%c0_77, %c0_78] : memref<128x128xbf16, #tpu.memory_space<vmem>>, vector<128x128xbf16>
    %87 = arith.truncf %85 : vector<2x128xf32> to vector<2x128xbf16>
    %cst_79 = arith.constant dense<0.000000e+00> : vector<2x128xf32>
    %88 = tpu.matmul %87, %86, %cst_79 {dimension_numbers = #tpu.dot_dimension_numbers<[1], [0], [0], [1], [0, 0, 1, 1], [], []>} : vector<2x128xbf16>, vector<128x128xbf16>, vector<2x128xf32> -> vector<2x128xf32>
    %c0_80 = arith.constant 0 : index
    %c0_81 = arith.constant 0 : index
    %89 = vector.load %arg11[%c0_80, %c0_81] : memref<1x128xf32, #tpu.memory_space<vmem>>, vector<1x128xf32>
    %90 = vector.broadcast %89 : vector<1x128xf32> to vector<2x128xf32>
    %91 = arith.addf %88, %90 : vector<2x128xf32>
    %92 = math.tanh %91 : vector<2x128xf32>
    %c0_82 = arith.constant 0 : index
    %c0_83 = arith.constant 0 : index
    %93 = vector.load %arg12[%c0_82, %c0_83] : memref<128x128xbf16, #tpu.memory_space<vmem>>, vector<128x128xbf16>
    %94 = arith.truncf %92 : vector<2x128xf32> to vector<2x128xbf16>
    %cst_84 = arith.constant dense<0.000000e+00> : vector<2x128xf32>
    %95 = tpu.matmul %94, %93, %cst_84 {dimension_numbers = #tpu.dot_dimension_numbers<[1], [0], [0], [1], [0, 0, 1, 1], [], []>} : vector<2x128xbf16>, vector<128x128xbf16>, vector<2x128xf32> -> vector<2x128xf32>
    %c0_85 = arith.constant 0 : index
    %c0_86 = arith.constant 0 : index
    %96 = vector.load %arg13[%c0_85, %c0_86] : memref<1x128xf32, #tpu.memory_space<vmem>>, vector<1x128xf32>
    %97 = vector.broadcast %96 : vector<1x128xf32> to vector<2x128xf32>
    %98 = arith.addf %95, %97 : vector<2x128xf32>
    %c0_87 = arith.constant 0 : index
    %c0_88 = arith.constant 0 : index
    %99 = vector.load %arg14[%c0_87, %c0_88] : memref<2x128xf32, #tpu.memory_space<vmem>>, vector<2x128xf32>
    tpu.vector_store %arg14[%c0_87, %c0_88], %98 {strides = array<i32>} : memref<2x128xf32, #tpu.memory_space<vmem>>, vector<2x128xf32>,
    return
  }
  func.func @transform_0(%arg0: i32) -> (i32, i32) {
    %c0_i32 = arith.constant 0 : i32
    %c0_i32_0 = arith.constant 0 : i32
    return %arg0, %c0_i32 : i32, i32
  }
  func.func @transform_1(%arg0: i32) -> (i32, i32) {
    %c0_i32 = arith.constant 0 : i32
    %c0_i32_0 = arith.constant 0 : i32
    %c0_i32_1 = arith.constant 0 : i32
    return %c0_i32, %c0_i32_0 : i32, i32
  }
  func.func @transform_2(%arg0: i32) -> (i32, i32) {
    %c0_i32 = arith.constant 0 : i32
    %c0_i32_0 = arith.constant 0 : i32
    %c0_i32_1 = arith.constant 0 : i32
    return %c0_i32, %c0_i32_0 : i32, i32
  }
  func.func @transform_3(%arg0: i32) -> (i32, i32, i32) {
    %c0_i32 = arith.constant 0 : i32
    %c0_i32_0 = arith.constant 0 : i32
    %c0_i32_1 = arith.constant 0 : i32
    %c0_i32_2 = arith.constant 0 : i32
    return %c0_i32, %c0_i32_0, %c0_i32_1 : i32, i32, i32
  }
  func.func @transform_4(%arg0: i32) -> (i32, i32, i32) {
    %c0_i32 = arith.constant 0 : i32
    %c0_i32_0 = arith.constant 0 : i32
    %c0_i32_1 = arith.constant 0 : i32
    %c0_i32_2 = arith.constant 0 : i32
    return %c0_i32, %c0_i32_0, %c0_i32_1 : i32, i32, i32
  }
  func.func @transform_5(%arg0: i32) -> (i32, i32) {
    %c0_i32 = arith.constant 0 : i32
    %c0_i32_0 = arith.constant 0 : i32
    %c0_i32_1 = arith.constant 0 : i32
    return %c0_i32, %c0_i32_0 : i32, i32
  }
  func.func @transform_6(%arg0: i32) -> (i32, i32, i32) {
    %c0_i32 = arith.constant 0 : i32
    %c0_i32_0 = arith.constant 0 : i32
    %c0_i32_1 = arith.constant 0 : i32
    %c0_i32_2 = arith.constant 0 : i32
    return %c0_i32, %c0_i32_0, %c0_i32_1 : i32, i32, i32
  }
  func.func @transform_7(%arg0: i32) -> (i32, i32, i32) {
    %c0_i32 = arith.constant 0 : i32
    %c0_i32_0 = arith.constant 0 : i32
    %c0_i32_1 = arith.constant 0 : i32
    %c0_i32_2 = arith.constant 0 : i32
    return %c0_i32, %c0_i32_0, %c0_i32_1 : i32, i32, i32
  }
  func.func @transform_8(%arg0: i32) -> (i32, i32) {
    %c0_i32 = arith.constant 0 : i32
    %c0_i32_0 = arith.constant 0 : i32
    %c0_i32_1 = arith.constant 0 : i32
    return %c0_i32, %c0_i32_0 : i32, i32
  }
  func.func @transform_9(%arg0: i32) -> (i32, i32) {
    %c0_i32 = arith.constant 0 : i32
    %c0_i32_0 = arith.constant 0 : i32
    %c0_i32_1 = arith.constant 0 : i32
    return %c0_i32, %c0_i32_0 : i32, i32
  }
  func.func @transform_10(%arg0: i32) -> (i32, i32) {
    %c0_i32 = arith.constant 0 : i32
    %c0_i32_0 = arith.constant 0 : i32
    %c0_i32_1 = arith.constant 0 : i32
    return %c0_i32, %c0_i32_0 : i32, i32
  }
  func.func @transform_11(%arg0: i32) -> (i32, i32) {
    %c0_i32 = arith.constant 0 : i32
    %c0_i32_0 = arith.constant 0 : i32
    %c0_i32_1 = arith.constant 0 : i32
    return %c0_i32, %c0_i32_0 : i32, i32
  }
  func.func @transform_12(%arg0: i32) -> (i32, i32) {
    %c0_i32 = arith.constant 0 : i32
    %c0_i32_0 = arith.constant 0 : i32
    %c0_i32_1 = arith.constant 0 : i32
    return %c0_i32, %c0_i32_0 : i32, i32
  }
  func.func @transform_13(%arg0: i32) -> (i32, i32) {
    %c0_i32 = arith.constant 0 : i32
    %c0_i32_0 = arith.constant 0 : i32
    return %arg0, %c0_i32 : i32, i32
  }
}

</mosaic_0001>

<llo_original>
// kernel: lenet5_forward.1
$region0: #{lenet5_forward.1}
  #allocation0 [shape = 'u32[]', space=smem, size = 0x4, offset = 0x4, fixed_abs, tag = 'smem constant byte address 0x4 - core index']
  #allocation1 [shape = 'u32[144,128]{1,0:T(1,128)}', space=vmem, size = 0x12000, scoped, tag = 'internal scratch']
  %s0 = inlined_call_operand.vmem [shape: f32[48,140], index: 0, kind: input, shape index: {}]
  %s1 = inlined_call_operand.vmem [shape: bf16[140,144], index: 1, kind: input, shape index: {}]
  %s2 = inlined_call_operand.vmem [shape: f32[1,144], index: 2, kind: input, shape index: {}]
  %s3 = inlined_call_operand.vmem [shape: f32[5,16,48], index: 3, kind: input, shape index: {}]
  %s4 = inlined_call_operand.vmem [shape: bf16[5,144,128], index: 4, kind: input, shape index: {}]
  %s5 = inlined_call_operand.vmem [shape: f32[1,128], index: 5, kind: input, shape index: {}]
  %s6 = inlined_call_operand.vmem [shape: f32[4,2,16], index: 6, kind: input, shape index: {}]
  %s7 = inlined_call_operand.vmem [shape: bf16[4,128,128], index: 7, kind: input, shape index: {}]
  %s8 = inlined_call_operand.vmem [shape: f32[1,128], index: 8, kind: input, shape index: {}]
  %s9 = inlined_call_operand.vmem [shape: bf16[128,128], index: 9, kind: input, shape index: {}]
  %s10 = inlined_call_operand.vmem [shape: f32[1,128], index: 10, kind: input, shape index: {}]
  %s11 = inlined_call_operand.vmem [shape: bf16[128,128], index: 11, kind: input, shape index: {}]
  %s12 = inlined_call_operand.vmem [shape: f32[1,128], index: 12, kind: input, shape index: {}]
  %s13 = inlined_call_operand.hbm [shape: f32[2,128], index: 13, kind: output, shape index: {}]
  %s14 = sld [smem:[#allocation0]]
  $region62: #{lenet5_forward.1} parent=0
    _
  %s16 = ssub.s32 1, %s14
  %s17 = scalar_select 0, %s16, %s14
  $region1: #{lenet5_forward.1} parent=0
    #allocation2 [shape = 'u8[1024]{0}', space=vmem, size = 0x400, scoped, tag = 'output window, operand 0, single buffered']
    #allocation3 [shape = 's32[1]{0}', space=sflag, size = 0x4, scoped, tag = 'scoped memory for lenet5_forward.1']
    %18 = vsyncpa [#allocation3], 0
    // Predicated region
    $region2: #{lenet5_forward.1} parent=1 // pred_check
      _
    $region3: #{lenet5_forward.1} parent=1 // pred_check_branch
      %20 = sbr.rel (0) target = $region5
    $region4: #{lenet5_forward.1} parent=1 // pred_region
      _
    $region5: #{lenet5_forward.1} parent=1 // pred_fallthru
      _
    // Predicated region
    $region6: #{lenet5_forward.1} parent=1 // pred_check
      _
    $region7: #{lenet5_forward.1} parent=1 // pred_check_branch
      %22 = sbr.rel (0) target = $region9
    $region8: #{lenet5_forward.1} parent=1 // pred_region
      _
    $region9: #{lenet5_forward.1} parent=1 // pred_fallthru
      _
    // Predicated region
    $region10: #{lenet5_forward.1} parent=1 // pred_check
      _
    $region11: #{lenet5_forward.1} parent=1 // pred_check_branch
      %24 = sbr.rel (0) target = $region13
    $region12: #{lenet5_forward.1} parent=1 // pred_region
      _
    $region13: #{lenet5_forward.1} parent=1 // pred_fallthru
      _
    // Predicated region
    $region14: #{lenet5_forward.1} parent=1 // pred_check
      _
    $region15: #{lenet5_forward.1} parent=1 // pred_check_branch
      %26 = sbr.rel (0) target = $region17
    $region16: #{lenet5_forward.1} parent=1 // pred_region
      _
    $region17: #{lenet5_forward.1} parent=1 // pred_fallthru
      _
    // Predicated region
    $region18: #{lenet5_forward.1} parent=1 // pred_check
      _
    $region19: #{lenet5_forward.1} parent=1 // pred_check_branch
      %28 = sbr.rel (0) target = $region21
    $region20: #{lenet5_forward.1} parent=1 // pred_region
      _
    $region21: #{lenet5_forward.1} parent=1 // pred_fallthru
      _
    // Predicated region
    $region22: #{lenet5_forward.1} parent=1 // pred_check
      _
    $region23: #{lenet5_forward.1} parent=1 // pred_check_branch
      %30 = sbr.rel (0) target = $region25
    $region24: #{lenet5_forward.1} parent=1 // pred_region
      _
    $region25: #{lenet5_forward.1} parent=1 // pred_fallthru
      _
    // Predicated region
    $region26: #{lenet5_forward.1} parent=1 // pred_check
      _
    $region27: #{lenet5_forward.1} parent=1 // pred_check_branch
      %32 = sbr.rel (0) target = $region29
    $region28: #{lenet5_forward.1} parent=1 // pred_region
      _
    $region29: #{lenet5_forward.1} parent=1 // pred_fallthru
      _
    // Predicated region
    $region30: #{lenet5_forward.1} parent=1 // pred_check
      _
    $region31: #{lenet5_forward.1} parent=1 // pred_check_branch
      %34 = sbr.rel (0) target = $region33
    $region32: #{lenet5_forward.1} parent=1 // pred_region
      _
    $region33: #{lenet5_forward.1} parent=1 // pred_fallthru
      _
    // Predicated region
    $region34: #{lenet5_forward.1} parent=1 // pred_check
      _
    $region35: #{lenet5_forward.1} parent=1 // pred_check_branch
      %36 = sbr.rel (0) target = $region37
    $region36: #{lenet5_forward.1} parent=1 // pred_region
      _
    $region37: #{lenet5_forward.1} parent=1 // pred_fallthru
      _
    // Predicated region
    $region38: #{lenet5_forward.1} parent=1 // pred_check
      _
    $region39: #{lenet5_forward.1} parent=1 // pred_check_branch
      %38 = sbr.rel (0) target = $region41
    $region40: #{lenet5_forward.1} parent=1 // pred_region
      _
    $region41: #{lenet5_forward.1} parent=1 // pred_fallthru
      _
    // Predicated region
    $region42: #{lenet5_forward.1} parent=1 // pred_check
      _
    $region43: #{lenet5_forward.1} parent=1 // pred_check_branch
      %40 = sbr.rel (0) target = $region45
    $region44: #{lenet5_forward.1} parent=1 // pred_region
      _
    $region45: #{lenet5_forward.1} parent=1 // pred_fallthru
      _
    // Predicated region
    $region46: #{lenet5_forward.1} parent=1 // pred_check
      _
    $region47: #{lenet5_forward.1} parent=1 // pred_check_branch
      %42 = sbr.rel (0) target = $region49
    $region48: #{lenet5_forward.1} parent=1 // pred_region
      _
    $region49: #{lenet5_forward.1} parent=1 // pred_fallthru
      _
    // Predicated region
    $region50: #{lenet5_forward.1} parent=1 // pred_check
      _
    $region51: #{lenet5_forward.1} parent=1 // pred_check_branch
      %44 = sbr.rel (0) target = $region53
    $region52: #{lenet5_forward.1} parent=1 // pred_region
      _
    $region53: #{lenet5_forward.1} parent=1 // pred_fallthru
      _
    %v46 = vld [vmem:[%s0] sm:$0xff]
    %v47 = vld [vmem:[%s0 + $0x8] sm:$0xff]
    %v48 = vld [vmem:[%s0 + $0x10] sm:$0xff]
    %v49 = vld [vmem:[%s0 + $0x18] sm:$0xff]
    %v50 = vld [vmem:[%s0 + $0x20] sm:$0xff]
    %v51 = vld [vmem:[%s0 + $0x28] sm:$0xff]
    %v52 = vld [vmem:[%s0 + $0x30] sm:$0xff]
    %v53 = vld [vmem:[%s0 + $0x38] sm:$0xff]
    %v54 = vld [vmem:[%s0 + $0x40] sm:$0xff]
    %v55 = vld [vmem:[%s0 + $0x48] sm:$0xff]
    %v56 = vld [vmem:[%s0 + $0x50] sm:$0xff]
    %v57 = vld [vmem:[%s0 + $0x58] sm:$0xff]
    %v58 = vld [vmem:[%s1] sm:$0xff]
    %v59 = vld [vmem:[%s1 + $0x8] sm:$0xff]
    %v60 = vld [vmem:[%s1 + $0x10] sm:$0xff]
    %v61 = vld [vmem:[%s1 + $0x18] sm:$0xff]
    %v62 = vld [vmem:[%s1 + $0x20] sm:$0xff]
    %v63 = vld [vmem:[%s1 + $0x28] sm:$0xff]
    %v64 = vld [vmem:[%s1 + $0x30] sm:$0xff]
    %v65 = vld [vmem:[%s1 + $0x38] sm:$0xff]
    %v66 = vld [vmem:[%s1 + $0x40] sm:$0xff]
    %v67 = vld [vmem:[%s1 + $0x48] sm:$0xff]
    %v68 = vld [vmem:[%s1 + $0x50] sm:$0xff]
    %v69 = vld [vmem:[%s1 + $0x58] sm:$0xff]
    %v70 = vld [vmem:[%s1 + $0x60] sm:$0xff]
    %v71 = vld [vmem:[%s1 + $0x68] sm:$0xff]
    %v72 = vld [vmem:[%s1 + $0x70] sm:$0xff]
    %v73 = vld [vmem:[%s1 + $0x78] sm:$0xff]
    %v74 = vld [vmem:[%s1 + $0x80] sm:$0xff]
    %v75 = vld [vmem:[%s1 + $0x88] sm:$0x33]
    %v76 = vpack.c.bf16 %v48, %v46
    %v77 = vpack.c.bf16 %v49, %v47
    %v78 = vpack.c.bf16 %v52, %v50
    %v79 = vpack.c.bf16 %v53, %v51
    %v80 = vpack.c.bf16 %v56, %v54
    %v81 = vpack.c.bf16 %v57, %v55
    %v82 = vld [vmem:[%s2] sm:$0x3]
    %v84 = vlaneseq
    %v85 = vshrl.u32 %v84, 7
    %v86 = vsub.s32 0, %v85
    %v87 = vrot.slane %v82, %v86
    %v88 = vlaneseq
    %v89 = vshrl.u32 %v88, 7
    %v90 = vsub.s32 1, %v89
    %v91 = vrot.slane %v82, %v90
    %v112 = vunpack.c.l.b16 %v58
    %v113 = vunpack.c.h.b16 %v58
    %v114 = vunpack.c.l.b16 %v59
    %v115 = vunpack.c.h.b16 %v59
    %v116 = vunpack.c.l.b16 %v60
    %v117 = vunpack.c.h.b16 %v60
    %v118 = vunpack.c.l.b16 %v61
    %v119 = vunpack.c.h.b16 %v61
    %v120 = vunpack.c.l.b16 %v62
    %v121 = vunpack.c.h.b16 %v62
    %v122 = vunpack.c.l.b16 %v63
    %v123 = vunpack.c.h.b16 %v63
    %v124 = vunpack.c.l.b16 %v64
    %v125 = vunpack.c.h.b16 %v64
    %v126 = vunpack.c.l.b16 %v65
    %v127 = vunpack.c.h.b16 %v65
    %v128 = vunpack.c.l.b16 %v66
    %v129 = vunpack.c.h.b16 %v66
    %v130 = vunpack.c.l.b16 %v67
    %v131 = vunpack.c.h.b16 %v67
    %v132 = vunpack.c.l.b16 %v68
    %v133 = vunpack.c.h.b16 %v68
    %v134 = vunpack.c.l.b16 %v69
    %v135 = vunpack.c.h.b16 %v69
    %v136 = vunpack.c.l.b16 %v70
    %v137 = vunpack.c.h.b16 %v70
    %v138 = vunpack.c.l.b16 %v71
    %v139 = vunpack.c.h.b16 %v71
    %v140 = vunpack.c.l.b16 %v72
    %v141 = vunpack.c.h.b16 %v72
    %v142 = vunpack.c.l.b16 %v73
    %v143 = vunpack.c.h.b16 %v73
    %v144 = vunpack.c.l.b16 %v74
    %v145 = vunpack.c.h.b16 %v74
    %v146 = vunpack.c.l.b16 %v75
    %v147 = vunpack.c.h.b16 %v75
    %v148 = vpack.c.b16 %v114, %v112
    %v149 = vpack.c.b16 %v115, %v113
    %v150 = vpack.c.b16 %v118, %v116
    %v151 = vpack.c.b16 %v119, %v117
    %v152 = vpack.c.b16 %v122, %v120
    %v153 = vpack.c.b16 %v123, %v121
    %v154 = vpack.c.b16 %v126, %v124
    %v155 = vpack.c.b16 %v127, %v125
    %v156 = vpack.c.b16 %v130, %v128
    %v157 = vpack.c.b16 %v131, %v129
    %v158 = vpack.c.b16 %v134, %v132
    %v159 = vpack.c.b16 %v135, %v133
    %v160 = vpack.c.b16 %v138, %v136
    %v161 = vpack.c.b16 %v139, %v137
    %v162 = vpack.c.b16 %v142, %v140
    %v163 = vpack.c.b16 %v143, %v141
    %v164 = vpack.c.b16 %v146, %v144
    %v165 = vpack.c.b16 %v147, %v145
    %vm182 = vcmask 97280
    %v184 = vsel %vm182, %v77, 0
    %v187 = vsel %vm182, %v79, 0
    %v190 = vsel %vm182, %v81, 0
    %vm192 = vcmask 1045504
    %v194 = vsel %vm192, %v164, 0
    %v197 = vsel %vm192, %v165, 0
    %199 = vmatprep.subr.bf16.mxu0 %v149
    %200 = vmatpush1.bf16.msra.mxu0 %v148
    %201 = vmatprep.subr.bf16.mxu0 %v151
    %202 = vmatpush1.bf16.msra.mxu0 %v150
    %203 = vmatprep.subr.bf16.mxu0 %v153
    %204 = vmatpush1.bf16.msra.mxu0 %v152
    %205 = vmatprep.subr.bf16.mxu0 %v155
    %206 = vmatpush1.bf16.msra.mxu0 %v154
    %207 = vmatprep.subr.bf16.mxu0 %v157
    %208 = vmatpush1.bf16.msra.mxu0 %v156
    %209 = vmatprep.subr.bf16.mxu0 %v159
    %210 = vmatpush1.bf16.msra.mxu0 %v158
    %211 = vmatprep.subr.bf16.mxu0 %v161
    %212 = vmatpush1.bf16.msra.mxu0 %v160
    %213 = vmatprep.subr.bf16.mxu0 %v163
    %214 = vmatpush1.bf16.msra.mxu0 %v162
    %215 = vmatprep.subr.bf16.mxu0 %v197
    %216 = vmatpush1.bf16.msra.mxu0 %v194
    %217 = vmatprep.subr.bf16.mxu0 0
    %218 = vmatpush1.bf16.msra.mxu0 0
    %219 = vmatprep.subr.bf16.mxu0 0
    %220 = vmatpush1.bf16.msra.mxu0 0
    %221 = vmatprep.subr.bf16.mxu0 0
    %222 = vmatpush1.bf16.msra.mxu0 0
    %223 = vmatprep.subr.bf16.mxu0 0
    %224 = vmatpush1.bf16.msra.mxu0 0
    %225 = vmatprep.subr.bf16.mxu0 0
    %226 = vmatpush1.bf16.msra.mxu0 0
    %227 = vmatprep.subr.bf16.mxu0 0
    %228 = vmatpush1.bf16.msra.mxu0 0
    %229 = vmatprep.subr.bf16.mxu0 0
    %230 = vmatpush1.bf16.msra.mxu0 0
    %231 = vmatprep.mubr.bf16.mxu0 %v184
    %232 = vmatmul.mubr.bf16.gmra.mrb[0].mxu0 %v76
    %v233 = vpop.f32.mrb[0].mxu0
    %v234 = vadd.f32 %v87, %v233
    %v235 = vpop.f32.mrb[0].mxu0
    %v236 = vadd.f32 %v91, %v235
    %v237 = vpop.f32.mrb[0].mxu0
    %v238 = vadd.f32 %v87, %v237
    %v239 = vpop.f32.mrb[0].mxu0
    %v240 = vadd.f32 %v91, %v239
    %241 = vmatprep.mubr.bf16.mxu0 %v187
    %242 = vmatmul.mubr.bf16.gmra.mrb[0].mxu0 %v78
    %v243 = vpop.f32.mrb[0].mxu0
    %v244 = vadd.f32 %v87, %v243
    %v245 = vpop.f32.mrb[0].mxu0
    %v246 = vadd.f32 %v91, %v245
    %v247 = vpop.f32.mrb[0].mxu0
    %v248 = vadd.f32 %v87, %v247
    %v249 = vpop.f32.mrb[0].mxu0
    %v250 = vadd.f32 %v91, %v249
    %251 = vmatprep.mubr.bf16.mxu0 %v190
    %252 = vmatmul.mubr.bf16.gmra.mrb[0].mxu0 %v80
    %v253 = vpop.f32.mrb[0].mxu0
    %v254 = vadd.f32 %v87, %v253
    %v255 = vpop.f32.mrb[0].mxu0
    %v256 = vadd.f32 %v91, %v255
    %v257 = vpop.f32.mrb[0].mxu0
    %v258 = vadd.f32 %v87, %v257
    %v259 = vpop.f32.mrb[0].mxu0
    %v260 = vadd.f32 %v91, %v259
    %261 = vdwg.mxu0
    %v262 = vtanh.pop %v234
    %v263 = vtanh.pop %v236
    %v264 = vtanh.pop %v238
    %v265 = vtanh.pop %v240
    %v266 = vtanh.pop %v244
    %v267 = vtanh.pop %v246
    %v268 = vtanh.pop %v248
    %v269 = vtanh.pop %v250
    %v270 = vtanh.pop %v254
    %v271 = vtanh.pop %v256
    %v272 = vtanh.pop %v258
    %v273 = vtanh.pop %v260
    %v274 = vld [vmem:[%s3] sm:$0xff]
    %v275 = vld [vmem:[%s3 + $0x8] sm:$0xff]
    %vm276 = vcmask 392192
    %v278 = vsel %vm276, %v274, 0
    %v281 = vsel %vm276, %v275, 0
    %283 = vmatprep.subr.mxu0 %v263
    %284 = vmatpush1.msra.mxu0 %v262
    %285 = vmatprep.subr.mxu0 %v265
    %286 = vmatpush1.msra.mxu0 %v264
    %287 = vmatprep.subr.mxu0 %v267
    %288 = vmatpush1.msra.mxu0 %v266
    %289 = vmatprep.subr.mxu0 %v269
    %290 = vmatpush1.msra.mxu0 %v268
    %291 = vmatprep.subr.mxu0 %v271
    %292 = vmatpush1.msra.mxu0 %v270
    %293 = vmatprep.subr.mxu0 %v273
    %294 = vmatpush1.msra.mxu0 %v272
    %295 = vmatprep.subr.mxu0 0.0
    %296 = vmatpush1.msra.mxu0 0.0
    %297 = vmatprep.subr.mxu0 0.0
    %298 = vmatpush1.msra.mxu0 0.0
    %299 = vmatprep.subr.mxu0 0.0
    %300 = vmatpush1.msra.mxu0 0.0
    %301 = vmatprep.subr.mxu0 0.0
    %302 = vmatpush1.msra.mxu0 0.0
    %303 = vmatprep.subr.mxu0 0.0
    %304 = vmatpush1.msra.mxu0 0.0
    %305 = vmatprep.subr.mxu0 0.0
    %306 = vmatpush1.msra.mxu0 0.0
    %307 = vmatprep.subr.mxu0 0.0
    %308 = vmatpush1.msra.mxu0 0.0
    %309 = vmatprep.subr.mxu0 0.0
    %310 = vmatpush1.msra.mxu0 0.0
    %311 = vmatprep.subr.mxu0 0.0
    %312 = vmatpush1.msra.mxu0 0.0
    %313 = vmatprep.subr.mxu0 0.0
    %314 = vmatpush1.msra.mxu0 0.0
    %315 = vmatprep.subr.mxu0 0.0
    %316 = vmatpush1.msra.mxu0 0.0
    %317 = vmatprep.subr.mxu0 0.0
    %318 = vmatpush1.msra.mxu0 0.0
    %319 = vmatprep.subr.mxu0 0.0
    %320 = vmatpush1.msra.mxu0 0.0
    %321 = vmatprep.subr.mxu0 0.0
    %322 = vmatpush1.msra.mxu0 0.0
    %323 = vmatprep.subr.mxu0 0.0
    %324 = vmatpush1.msra.mxu0 0.0
    %325 = vmatprep.subr.mxu0 0.0
    %326 = vmatpush1.msra.mxu0 0.0
    %327 = vmatprep.subr.mxu0 0.0
    %328 = vmatpush1.msra.mxu0 0.0
    %329 = vmatprep.subr.mxu0 0.0
    %330 = vmatpush1.msra.mxu0 0.0
    %331 = vmatprep.subr.mxu0 0.0
    %332 = vmatpush1.msra.mxu0 0.0
    %333 = vmatprep.subr.mxu0 0.0
    %334 = vmatpush1.msra.mxu0 0.0
    %335 = vmatprep.subr.mxu0 0.0
    %336 = vmatpush1.msra.mxu0 0.0
    %337 = vmatprep.subr.mxu0 0.0
    %338 = vmatpush1.msra.mxu0 0.0
    %339 = vmatprep.subr.mxu0 0.0
    %340 = vmatpush1.msra.mxu0 0.0
    %341 = vmatprep.subr.mxu0 0.0
    %342 = vmatpush1.msra.mxu0 0.0
    %343 = vmatprep.subr.mxu0 0.0
    %344 = vmatpush1.msra.mxu0 0.0
    %345 = vmatprep.subr.mxu0 0.0
    %346 = vmatpush1.msra.mxu0 0.0
    %347 = vmatprep.mubr.f32.mxu0 0.0
    %348 = vmatmul.mubr.f32.gmra.mrb[0].mxu0 %v278
    %v349 = vpop.f32.mrb[0].mxu0
    %v350 = vadd.f32 0.0, %v349
    %v351 = vpop.f32.mrb[0].mxu0
    %v352 = vadd.f32 0.0, %v351
    %353 = vmatprep.mubr.f32.mxu0 0.0
    %354 = vmatmul.mubr.f32.gmra.mrb[0].mxu0 %v281
    %v355 = vpop.f32.mrb[0].mxu0
    %v356 = vadd.f32 0.0, %v355
    %v357 = vpop.f32.mrb[0].mxu0
    %v358 = vadd.f32 0.0, %v357
    %359 = vdwg.mxu0
    %v360 = vld [vmem:[%s4] sm:$0xf]
    %v361 = vld [vmem:[%s4 + $0x4] sm:$0xf]
    %v362 = vld [vmem:[%s4 + $0x8] sm:$0xf]
    %v363 = vld [vmem:[%s4 + $0xc] sm:$0xf]
    %v364 = vld [vmem:[%s4 + $0x10] sm:$0xf]
    %v365 = vld [vmem:[%s4 + $0x14] sm:$0xf]
    %v366 = vld [vmem:[%s4 + $0x18] sm:$0xf]
    %v367 = vld [vmem:[%s4 + $0x1c] sm:$0xf]
    %v368 = vld [vmem:[%s4 + $0x20] sm:$0xf]
    %v369 = vld [vmem:[%s4 + $0x24] sm:$0xf]
    %v370 = vld [vmem:[%s4 + $0x28] sm:$0xf]
    %v371 = vld [vmem:[%s4 + $0x2c] sm:$0xf]
    %v372 = vld [vmem:[%s4 + $0x30] sm:$0xf]
    %v373 = vld [vmem:[%s4 + $0x34] sm:$0xf]
    %v374 = vld [vmem:[%s4 + $0x38] sm:$0xf]
    %v375 = vld [vmem:[%s4 + $0x3c] sm:$0xf]
    %v376 = vld [vmem:[%s4 + $0x40] sm:$0xf]
    %v377 = vld [vmem:[%s4 + $0x44] sm:$0xf]
    %v378 = vpack.c.bf16 %v356, %v350
    %v379 = vpack.c.bf16 %v358, %v352
    %s380 = scalar_lea.vmem %s3, 16
    %v381 = vld [vmem:[%s380] sm:$0xff]
    %v382 = vld [vmem:[%s380 + $0x8] sm:$0xff]
    %v384 = vsel %vm276, %v381, 0
    %v387 = vsel %vm276, %v382, 0
    %389 = vmatprep.subr.mxu0 %v263
    %390 = vmatpush1.msra.mxu0 %v262
    %391 = vmatprep.subr.mxu0 %v265
    %392 = vmatpush1.msra.mxu0 %v264
    %393 = vmatprep.subr.mxu0 %v267
    %394 = vmatpush1.msra.mxu0 %v266
    %395 = vmatprep.subr.mxu0 %v269
    %396 = vmatpush1.msra.mxu0 %v268
    %397 = vmatprep.subr.mxu0 %v271
    %398 = vmatpush1.msra.mxu0 %v270
    %399 = vmatprep.subr.mxu0 %v273
    %400 = vmatpush1.msra.mxu0 %v272
    %401 = vmatprep.subr.mxu0 0.0
    %402 = vmatpush1.msra.mxu0 0.0
    %403 = vmatprep.subr.mxu0 0.0
    %404 = vmatpush1.msra.mxu0 0.0
    %405 = vmatprep.subr.mxu0 0.0
    %406 = vmatpush1.msra.mxu0 0.0
    %407 = vmatprep.subr.mxu0 0.0
    %408 = vmatpush1.msra.mxu0 0.0
    %409 = vmatprep.subr.mxu0 0.0
    %410 = vmatpush1.msra.mxu0 0.0
    %411 = vmatprep.subr.mxu0 0.0
    %412 = vmatpush1.msra.mxu0 0.0
    %413 = vmatprep.subr.mxu0 0.0
    %414 = vmatpush1.msra.mxu0 0.0
    %415 = vmatprep.subr.mxu0 0.0
    %416 = vmatpush1.msra.mxu0 0.0
    %417 = vmatprep.subr.mxu0 0.0
    %418 = vmatpush1.msra.mxu0 0.0
    %419 = vmatprep.subr.mxu0 0.0
    %420 = vmatpush1.msra.mxu0 0.0
    %421 = vmatprep.subr.mxu0 0.0
    %422 = vmatpush1.msra.mxu0 0.0
    %423 = vmatprep.subr.mxu0 0.0
    %424 = vmatpush1.msra.mxu0 0.0
    %425 = vmatprep.subr.mxu0 0.0
    %426 = vmatpush1.msra.mxu0 0.0
    %427 = vmatprep.subr.mxu0 0.0
    %428 = vmatpush1.msra.mxu0 0.0
    %429 = vmatprep.subr.mxu0 0.0
    %430 = vmatpush1.msra.mxu0 0.0
    %431 = vmatprep.subr.mxu0 0.0
    %432 = vmatpush1.msra.mxu0 0.0
    %433 = vmatprep.subr.mxu0 0.0
    %434 = vmatpush1.msra.mxu0 0.0
    %435 = vmatprep.subr.mxu0 0.0
    %436 = vmatpush1.msra.mxu0 0.0
    %437 = vmatprep.subr.mxu0 0.0
    %438 = vmatpush1.msra.mxu0 0.0
    %439 = vmatprep.subr.mxu0 0.0
    %440 = vmatpush1.msra.mxu0 0.0
    %441 = vmatprep.subr.mxu0 0.0
    %442 = vmatpush1.msra.mxu0 0.0
    %443 = vmatprep.subr.mxu0 0.0
    %444 = vmatpush1.msra.mxu0 0.0
    %445 = vmatprep.subr.mxu0 0.0
    %446 = vmatpush1.msra.mxu0 0.0
    %447 = vmatprep.subr.mxu0 0.0
    %448 = vmatpush1.msra.mxu0 0.0
    %449 = vmatprep.subr.mxu0 0.0
    %450 = vmatpush1.msra.mxu0 0.0
    %451 = vmatprep.subr.mxu0 0.0
    %452 = vmatpush1.msra.mxu0 0.0
    %453 = vmatprep.mubr.f32.mxu0 0.0
    %454 = vmatmul.mubr.f32.gmra.mrb[0].mxu0 %v384
    %v455 = vpop.f32.mrb[0].mxu0
    %v456 = vadd.f32 0.0, %v455
    %v457 = vpop.f32.mrb[0].mxu0
    %v458 = vadd.f32 0.0, %v457
    %459 = vmatprep.mubr.f32.mxu0 0.0
    %460 = vmatmul.mubr.f32.gmra.mrb[0].mxu0 %v387
    %v461 = vpop.f32.mrb[0].mxu0
    %v462 = vadd.f32 0.0, %v461
    %v463 = vpop.f32.mrb[0].mxu0
    %v464 = vadd.f32 0.0, %v463
    %465 = vdwg.mxu0
    %s466 = scalar_lea.vmem %s4, 72
    %v467 = vld [vmem:[%s466] sm:$0xf]
    %v468 = vld [vmem:[%s466 + $0x4] sm:$0xf]
    %v469 = vld [vmem:[%s466 + $0x8] sm:$0xf]
    %v470 = vld [vmem:[%s466 + $0xc] sm:$0xf]
    %v471 = vld [vmem:[%s466 + $0x10] sm:$0xf]
    %v472 = vld [vmem:[%s466 + $0x14] sm:$0xf]
    %v473 = vld [vmem:[%s466 + $0x18] sm:$0xf]
    %v474 = vld [vmem:[%s466 + $0x1c] sm:$0xf]
    %v475 = vld [vmem:[%s466 + $0x20] sm:$0xf]
    %v476 = vld [vmem:[%s466 + $0x24] sm:$0xf]
    %v477 = vld [vmem:[%s466 + $0x28] sm:$0xf]
    %v478 = vld [vmem:[%s466 + $0x2c] sm:$0xf]
    %v479 = vld [vmem:[%s466 + $0x30] sm:$0xf]
    %v480 = vld [vmem:[%s466 + $0x34] sm:$0xf]
    %v481 = vld [vmem:[%s466 + $0x38] sm:$0xf]
    %v482 = vld [vmem:[%s466 + $0x3c] sm:$0xf]
    %v483 = vld [vmem:[%s466 + $0x40] sm:$0xf]
    %v484 = vld [vmem:[%s466 + $0x44] sm:$0xf]
    %v485 = vpack.c.bf16 %v462, %v456
    %v486 = vpack.c.bf16 %v464, %v458
    %v505 = vunpack.c.l.b16 %v467
    %v506 = vunpack.c.l.b16 %v468
    %v507 = vunpack.c.l.b16 %v469
    %v508 = vunpack.c.l.b16 %v470
    %v509 = vunpack.c.l.b16 %v471
    %v510 = vunpack.c.l.b16 %v472
    %v511 = vunpack.c.l.b16 %v473
    %v512 = vunpack.c.l.b16 %v474
    %v513 = vunpack.c.l.b16 %v475
    %v514 = vunpack.c.l.b16 %v476
    %v515 = vunpack.c.l.b16 %v477
    %v516 = vunpack.c.l.b16 %v478
    %v517 = vunpack.c.l.b16 %v479
    %v518 = vunpack.c.l.b16 %v480
    %v519 = vunpack.c.l.b16 %v481
    %v520 = vunpack.c.l.b16 %v482
    %v521 = vunpack.c.l.b16 %v483
    %v522 = vunpack.c.l.b16 %v484
    %v523 = vpack.c.b16 %v506, %v505
    %v524 = vpack.c.b16 %v508, %v507
    %v525 = vpack.c.b16 %v510, %v509
    %v526 = vpack.c.b16 %v512, %v511
    %v527 = vpack.c.b16 %v514, %v513
    %v528 = vpack.c.b16 %v516, %v515
    %v529 = vpack.c.b16 %v518, %v517
    %v530 = vpack.c.b16 %v520, %v519
    %v531 = vpack.c.b16 %v522, %v521
    %vm541 = vcmask 130048
    %v543 = vsel %vm541, %v486, 0
    %545 = vmatprep.subr.bf16.mxu0 0
    %546 = vmatpush1.bf16.msra.mxu0 %v523
    %547 = vmatprep.subr.bf16.mxu0 0
    %548 = vmatpush1.bf16.msra.mxu0 %v524
    %549 = vmatprep.subr.bf16.mxu0 0
    %550 = vmatpush1.bf16.msra.mxu0 %v525
    %551 = vmatprep.subr.bf16.mxu0 0
    %552 = vmatpush1.bf16.msra.mxu0 %v526
    %553 = vmatprep.subr.bf16.mxu0 0
    %554 = vmatpush1.bf16.msra.mxu0 %v527
    %555 = vmatprep.subr.bf16.mxu0 0
    %556 = vmatpush1.bf16.msra.mxu0 %v528
    %557 = vmatprep.subr.bf16.mxu0 0
    %558 = vmatpush1.bf16.msra.mxu0 %v529
    %559 = vmatprep.subr.bf16.mxu0 0
    %560 = vmatpush1.bf16.msra.mxu0 %v530
    %561 = vmatprep.subr.bf16.mxu0 0
    %562 = vmatpush1.bf16.msra.mxu0 %v531
    %563 = vmatprep.subr.bf16.mxu0 0
    %564 = vmatpush1.bf16.msra.mxu0 0
    %565 = vmatprep.subr.bf16.mxu0 0
    %566 = vmatpush1.bf16.msra.mxu0 0
    %567 = vmatprep.subr.bf16.mxu0 0
    %568 = vmatpush1.bf16.msra.mxu0 0
    %569 = vmatprep.subr.bf16.mxu0 0
    %570 = vmatpush1.bf16.msra.mxu0 0
    %571 = vmatprep.subr.bf16.mxu0 0
    %572 = vmatpush1.bf16.msra.mxu0 0
    %573 = vmatprep.subr.bf16.mxu0 0
    %574 = vmatpush1.bf16.msra.mxu0 0
    %575 = vmatprep.subr.bf16.mxu0 0
    %576 = vmatpush1.bf16.msra.mxu0 0
    %577 = vmatprep.mubr.bf16.mxu0 %v543
    %578 = vmatmul.mubr.bf16.gmra.mrb[0].mxu0 %v485
    %v579 = vpop.f32.mrb[0].mxu0
    %v580 = vadd.f32 0.0, %v579
    %v581 = vpop.f32.mrb[0].mxu0
    %v582 = vpop.f32.mrb[0].mxu0
    %v583 = vadd.f32 0.0, %v582
    %v584 = vpop.f32.mrb[0].mxu0
    %585 = vdwg.mxu0
    %v604 = vunpack.c.l.b16 %v360
    %v605 = vunpack.c.l.b16 %v361
    %v606 = vunpack.c.l.b16 %v362
    %v607 = vunpack.c.l.b16 %v363
    %v608 = vunpack.c.l.b16 %v364
    %v609 = vunpack.c.l.b16 %v365
    %v610 = vunpack.c.l.b16 %v366
    %v611 = vunpack.c.l.b16 %v367
    %v612 = vunpack.c.l.b16 %v368
    %v613 = vunpack.c.l.b16 %v369
    %v614 = vunpack.c.l.b16 %v370
    %v615 = vunpack.c.l.b16 %v371
    %v616 = vunpack.c.l.b16 %v372
    %v617 = vunpack.c.l.b16 %v373
    %v618 = vunpack.c.l.b16 %v374
    %v619 = vunpack.c.l.b16 %v375
    %v620 = vunpack.c.l.b16 %v376
    %v621 = vunpack.c.l.b16 %v377
    %v622 = vpack.c.b16 %v605, %v604
    %v623 = vpack.c.b16 %v607, %v606
    %v624 = vpack.c.b16 %v609, %v608
    %v625 = vpack.c.b16 %v611, %v610
    %v626 = vpack.c.b16 %v613, %v612
    %v627 = vpack.c.b16 %v615, %v614
    %v628 = vpack.c.b16 %v617, %v616
    %v629 = vpack.c.b16 %v619, %v618
    %v630 = vpack.c.b16 %v621, %v620
    %v641 = vsel %vm541, %v379, 0
    %643 = vmatprep.subr.bf16.mxu0 0
    %644 = vmatpush1.bf16.msra.mxu0 %v622
    %645 = vmatprep.subr.bf16.mxu0 0
    %646 = vmatpush1.bf16.msra.mxu0 %v623
    %647 = vmatprep.subr.bf16.mxu0 0
    %648 = vmatpush1.bf16.msra.mxu0 %v624
    %649 = vmatprep.subr.bf16.mxu0 0
    %650 = vmatpush1.bf16.msra.mxu0 %v625
    %651 = vmatprep.subr.bf16.mxu0 0
    %652 = vmatpush1.bf16.msra.mxu0 %v626
    %653 = vmatprep.subr.bf16.mxu0 0
    %654 = vmatpush1.bf16.msra.mxu0 %v627
    %655 = vmatprep.subr.bf16.mxu0 0
    %656 = vmatpush1.bf16.msra.mxu0 %v628
    %657 = vmatprep.subr.bf16.mxu0 0
    %658 = vmatpush1.bf16.msra.mxu0 %v629
    %659 = vmatprep.subr.bf16.mxu0 0
    %660 = vmatpush1.bf16.msra.mxu0 %v630
    %661 = vmatprep.subr.bf16.mxu0 0
    %662 = vmatpush1.bf16.msra.mxu0 0
    %663 = vmatprep.subr.bf16.mxu0 0
    %664 = vmatpush1.bf16.msra.mxu0 0
    %665 = vmatprep.subr.bf16.mxu0 0
    %666 = vmatpush1.bf16.msra.mxu0 0
    %667 = vmatprep.subr.bf16.mxu0 0
    %668 = vmatpush1.bf16.msra.mxu0 0
    %669 = vmatprep.subr.bf16.mxu0 0
    %670 = vmatpush1.bf16.msra.mxu0 0
    %671 = vmatprep.subr.bf16.mxu0 0
    %672 = vmatpush1.bf16.msra.mxu0 0
    %673 = vmatprep.subr.bf16.mxu0 0
    %674 = vmatpush1.bf16.msra.mxu0 0
    %675 = vmatprep.mubr.bf16.mxu0 %v641
    %676 = vmatmul.mubr.bf16.gmra.mrb[0].mxu0 %v378
    %v677 = vpop.f32.mrb[0].mxu0
    %v678 = vadd.f32 %v580, %v677
    %v679 = vpop.f32.mrb[0].mxu0
    %v680 = vpop.f32.mrb[0].mxu0
    %v681 = vadd.f32 %v583, %v680
    %v682 = vpop.f32.mrb[0].mxu0
    %683 = vdwg.mxu0
    %s684 = scalar_lea.vmem %s3, 32
    %v685 = vld [vmem:[%s684] sm:$0xff]
    %v686 = vld [vmem:[%s684 + $0x8] sm:$0xff]
    %v688 = vsel %vm276, %v685, 0
    %v691 = vsel %vm276, %v686, 0
    %693 = vmatprep.subr.mxu0 %v263
    %694 = vmatpush1.msra.mxu0 %v262
    %695 = vmatprep.subr.mxu0 %v265
    %696 = vmatpush1.msra.mxu0 %v264
    %697 = vmatprep.subr.mxu0 %v267
    %698 = vmatpush1.msra.mxu0 %v266
    %699 = vmatprep.subr.mxu0 %v269
    %700 = vmatpush1.msra.mxu0 %v268
    %701 = vmatprep.subr.mxu0 %v271
    %702 = vmatpush1.msra.mxu0 %v270
    %703 = vmatprep.subr.mxu0 %v273
    %704 = vmatpush1.msra.mxu0 %v272
    %705 = vmatprep.subr.mxu0 0.0
    %706 = vmatpush1.msra.mxu0 0.0
    %707 = vmatprep.subr.mxu0 0.0
    %708 = vmatpush1.msra.mxu0 0.0
    %709 = vmatprep.subr.mxu0 0.0
    %710 = vmatpush1.msra.mxu0 0.0
    %711 = vmatprep.subr.mxu0 0.0
    %712 = vmatpush1.msra.mxu0 0.0
    %713 = vmatprep.subr.mxu0 0.0
    %714 = vmatpush1.msra.mxu0 0.0
    %715 = vmatprep.subr.mxu0 0.0
    %716 = vmatpush1.msra.mxu0 0.0
    %717 = vmatprep.subr.mxu0 0.0
    %718 = vmatpush1.msra.mxu0 0.0
    %719 = vmatprep.subr.mxu0 0.0
    %720 = vmatpush1.msra.mxu0 0.0
    %721 = vmatprep.subr.mxu0 0.0
    %722 = vmatpush1.msra.mxu0 0.0
    %723 = vmatprep.subr.mxu0 0.0
    %724 = vmatpush1.msra.mxu0 0.0
    %725 = vmatprep.subr.mxu0 0.0
    %726 = vmatpush1.msra.mxu0 0.0
    %727 = vmatprep.subr.mxu0 0.0
    %728 = vmatpush1.msra.mxu0 0.0
    %729 = vmatprep.subr.mxu0 0.0
    %730 = vmatpush1.msra.mxu0 0.0
    %731 = vmatprep.subr.mxu0 0.0
    %732 = vmatpush1.msra.mxu0 0.0
    %733 = vmatprep.subr.mxu0 0.0
    %734 = vmatpush1.msra.mxu0 0.0
    %735 = vmatprep.subr.mxu0 0.0
    %736 = vmatpush1.msra.mxu0 0.0
    %737 = vmatprep.subr.mxu0 0.0
    %738 = vmatpush1.msra.mxu0 0.0
    %739 = vmatprep.subr.mxu0 0.0
    %740 = vmatpush1.msra.mxu0 0.0
    %741 = vmatprep.subr.mxu0 0.0
    %742 = vmatpush1.msra.mxu0 0.0
    %743 = vmatprep.subr.mxu0 0.0
    %744 = vmatpush1.msra.mxu0 0.0
    %745 = vmatprep.subr.mxu0 0.0
    %746 = vmatpush1.msra.mxu0 0.0
    %747 = vmatprep.subr.mxu0 0.0
    %748 = vmatpush1.msra.mxu0 0.0
    %749 = vmatprep.subr.mxu0 0.0
    %750 = vmatpush1.msra.mxu0 0.0
    %751 = vmatprep.subr.mxu0 0.0
    %752 = vmatpush1.msra.mxu0 0.0
    %753 = vmatprep.subr.mxu0 0.0
    %754 = vmatpush1.msra.mxu0 0.0
    %755 = vmatprep.subr.mxu0 0.0
    %756 = vmatpush1.msra.mxu0 0.0
    %757 = vmatprep.mubr.f32.mxu0 0.0
    %758 = vmatmul.mubr.f32.gmra.mrb[0].mxu0 %v688
    %v759 = vpop.f32.mrb[0].mxu0
    %v760 = vadd.f32 0.0, %v759
    %v761 = vpop.f32.mrb[0].mxu0
    %v762 = vadd.f32 0.0, %v761
    %763 = vmatprep.mubr.f32.mxu0 0.0
    %764 = vmatmul.mubr.f32.gmra.mrb[0].mxu0 %v691
    %v765 = vpop.f32.mrb[0].mxu0
    %v766 = vadd.f32 0.0, %v765
    %v767 = vpop.f32.mrb[0].mxu0
    %v768 = vadd.f32 0.0, %v767
    %769 = vdwg.mxu0
    %s770 = scalar_lea.vmem %s4, 144
    %v771 = vld [vmem:[%s770] sm:$0xf]
    %v772 = vld [vmem:[%s770 + $0x4] sm:$0xf]
    %v773 = vld [vmem:[%s770 + $0x8] sm:$0xf]
    %v774 = vld [vmem:[%s770 + $0xc] sm:$0xf]
    %v775 = vld [vmem:[%s770 + $0x10] sm:$0xf]
    %v776 = vld [vmem:[%s770 + $0x14] sm:$0xf]
    %v777 = vld [vmem:[%s770 + $0x18] sm:$0xf]
    %v778 = vld [vmem:[%s770 + $0x1c] sm:$0xf]
    %v779 = vld [vmem:[%s770 + $0x20] sm:$0xf]
    %v780 = vld [vmem:[%s770 + $0x24] sm:$0xf]
    %v781 = vld [vmem:[%s770 + $0x28] sm:$0xf]
    %v782 = vld [vmem:[%s770 + $0x2c] sm:$0xf]
    %v783 = vld [vmem:[%s770 + $0x30] sm:$0xf]
    %v784 = vld [vmem:[%s770 + $0x34] sm:$0xf]
    %v785 = vld [vmem:[%s770 + $0x38] sm:$0xf]
    %v786 = vld [vmem:[%s770 + $0x3c] sm:$0xf]
    %v787 = vld [vmem:[%s770 + $0x40] sm:$0xf]
    %v788 = vld [vmem:[%s770 + $0x44] sm:$0xf]
    %v789 = vpack.c.bf16 %v766, %v760
    %v790 = vpack.c.bf16 %v768, %v762
    %v809 = vunpack.c.l.b16 %v771
    %v810 = vunpack.c.l.b16 %v772
    %v811 = vunpack.c.l.b16 %v773
    %v812 = vunpack.c.l.b16 %v774
    %v813 = vunpack.c.l.b16 %v775
    %v814 = vunpack.c.l.b16 %v776
    %v815 = vunpack.c.l.b16 %v777
    %v816 = vunpack.c.l.b16 %v778
    %v817 = vunpack.c.l.b16 %v779
    %v818 = vunpack.c.l.b16 %v780
    %v819 = vunpack.c.l.b16 %v781
    %v820 = vunpack.c.l.b16 %v782
    %v821 = vunpack.c.l.b16 %v783
    %v822 = vunpack.c.l.b16 %v784
    %v823 = vunpack.c.l.b16 %v785
    %v824 = vunpack.c.l.b16 %v786
    %v825 = vunpack.c.l.b16 %v787
    %v826 = vunpack.c.l.b16 %v788
    %v827 = vpack.c.b16 %v810, %v809
    %v828 = vpack.c.b16 %v812, %v811
    %v829 = vpack.c.b16 %v814, %v813
    %v830 = vpack.c.b16 %v816, %v815
    %v831 = vpack.c.b16 %v818, %v817
    %v832 = vpack.c.b16 %v820, %v819
    %v833 = vpack.c.b16 %v822, %v821
    %v834 = vpack.c.b16 %v824, %v823
    %v835 = vpack.c.b16 %v826, %v825
    %v846 = vsel %vm541, %v790, 0
    %848 = vmatprep.subr.bf16.mxu0 0
    %849 = vmatpush1.bf16.msra.mxu0 %v827
    %850 = vmatprep.subr.bf16.mxu0 0
    %851 = vmatpush1.bf16.msra.mxu0 %v828
    %852 = vmatprep.subr.bf16.mxu0 0
    %853 = vmatpush1.bf16.msra.mxu0 %v829
    %854 = vmatprep.subr.bf16.mxu0 0
    %855 = vmatpush1.bf16.msra.mxu0 %v830
    %856 = vmatprep.subr.bf16.mxu0 0
    %857 = vmatpush1.bf16.msra.mxu0 %v831
    %858 = vmatprep.subr.bf16.mxu0 0
    %859 = vmatpush1.bf16.msra.mxu0 %v832
    %860 = vmatprep.subr.bf16.mxu0 0
    %861 = vmatpush1.bf16.msra.mxu0 %v833
    %862 = vmatprep.subr.bf16.mxu0 0
    %863 = vmatpush1.bf16.msra.mxu0 %v834
    %864 = vmatprep.subr.bf16.mxu0 0
    %865 = vmatpush1.bf16.msra.mxu0 %v835
    %866 = vmatprep.subr.bf16.mxu0 0
    %867 = vmatpush1.bf16.msra.mxu0 0
    %868 = vmatprep.subr.bf16.mxu0 0
    %869 = vmatpush1.bf16.msra.mxu0 0
    %870 = vmatprep.subr.bf16.mxu0 0
    %871 = vmatpush1.bf16.msra.mxu0 0
    %872 = vmatprep.subr.bf16.mxu0 0
    %873 = vmatpush1.bf16.msra.mxu0 0
    %874 = vmatprep.subr.bf16.mxu0 0
    %875 = vmatpush1.bf16.msra.mxu0 0
    %876 = vmatprep.subr.bf16.mxu0 0
    %877 = vmatpush1.bf16.msra.mxu0 0
    %878 = vmatprep.subr.bf16.mxu0 0
    %879 = vmatpush1.bf16.msra.mxu0 0
    %880 = vmatprep.mubr.bf16.mxu0 %v846
    %881 = vmatmul.mubr.bf16.gmra.mrb[0].mxu0 %v789
    %v882 = vpop.f32.mrb[0].mxu0
    %v883 = vadd.f32 0.0, %v882
    %v884 = vpop.f32.mrb[0].mxu0
    %v885 = vpop.f32.mrb[0].mxu0
    %v886 = vadd.f32 0.0, %v885
    %v887 = vpop.f32.mrb[0].mxu0
    %888 = vdwg.mxu0
    %v889 = vadd.f32 %v678, %v883
    %v890 = vadd.f32 %v681, %v886
    %s891 = scalar_lea.vmem %s3, 48
    %v892 = vld [vmem:[%s891] sm:$0xff]
    %v893 = vld [vmem:[%s891 + $0x8] sm:$0xff]
    %v895 = vsel %vm276, %v892, 0
    %v898 = vsel %vm276, %v893, 0
    %900 = vmatprep.subr.mxu0 %v263
    %901 = vmatpush1.msra.mxu0 %v262
    %902 = vmatprep.subr.mxu0 %v265
    %903 = vmatpush1.msra.mxu0 %v264
    %904 = vmatprep.subr.mxu0 %v267
    %905 = vmatpush1.msra.mxu0 %v266
    %906 = vmatprep.subr.mxu0 %v269
    %907 = vmatpush1.msra.mxu0 %v268
    %908 = vmatprep.subr.mxu0 %v271
    %909 = vmatpush1.msra.mxu0 %v270
    %910 = vmatprep.subr.mxu0 %v273
    %911 = vmatpush1.msra.mxu0 %v272
    %912 = vmatprep.subr.mxu0 0.0
    %913 = vmatpush1.msra.mxu0 0.0
    %914 = vmatprep.subr.mxu0 0.0
    %915 = vmatpush1.msra.mxu0 0.0
    %916 = vmatprep.subr.mxu0 0.0
    %917 = vmatpush1.msra.mxu0 0.0
    %918 = vmatprep.subr.mxu0 0.0
    %919 = vmatpush1.msra.mxu0 0.0
    %920 = vmatprep.subr.mxu0 0.0
    %921 = vmatpush1.msra.mxu0 0.0
    %922 = vmatprep.subr.mxu0 0.0
    %923 = vmatpush1.msra.mxu0 0.0
    %924 = vmatprep.subr.mxu0 0.0
    %925 = vmatpush1.msra.mxu0 0.0
    %926 = vmatprep.subr.mxu0 0.0
    %927 = vmatpush1.msra.mxu0 0.0
    %928 = vmatprep.subr.mxu0 0.0
    %929 = vmatpush1.msra.mxu0 0.0
    %930 = vmatprep.subr.mxu0 0.0
    %931 = vmatpush1.msra.mxu0 0.0
    %932 = vmatprep.subr.mxu0 0.0
    %933 = vmatpush1.msra.mxu0 0.0
    %934 = vmatprep.subr.mxu0 0.0
    %935 = vmatpush1.msra.mxu0 0.0
    %936 = vmatprep.subr.mxu0 0.0
    %937 = vmatpush1.msra.mxu0 0.0
    %938 = vmatprep.subr.mxu0 0.0
    %939 = vmatpush1.msra.mxu0 0.0
    %940 = vmatprep.subr.mxu0 0.0
    %941 = vmatpush1.msra.mxu0 0.0
    %942 = vmatprep.subr.mxu0 0.0
    %943 = vmatpush1.msra.mxu0 0.0
    %944 = vmatprep.subr.mxu0 0.0
    %945 = vmatpush1.msra.mxu0 0.0
    %946 = vmatprep.subr.mxu0 0.0
    %947 = vmatpush1.msra.mxu0 0.0
    %948 = vmatprep.subr.mxu0 0.0
    %949 = vmatpush1.msra.mxu0 0.0
    %950 = vmatprep.subr.mxu0 0.0
    %951 = vmatpush1.msra.mxu0 0.0
    %952 = vmatprep.subr.mxu0 0.0
    %953 = vmatpush1.msra.mxu0 0.0
    %954 = vmatprep.subr.mxu0 0.0
    %955 = vmatpush1.msra.mxu0 0.0
    %956 = vmatprep.subr.mxu0 0.0
    %957 = vmatpush1.msra.mxu0 0.0
    %958 = vmatprep.subr.mxu0 0.0
    %959 = vmatpush1.msra.mxu0 0.0
    %960 = vmatprep.subr.mxu0 0.0
    %961 = vmatpush1.msra.mxu0 0.0
    %962 = vmatprep.subr.mxu0 0.0
    %963 = vmatpush1.msra.mxu0 0.0
    %964 = vmatprep.mubr.f32.mxu0 0.0
    %965 = vmatmul.mubr.f32.gmra.mrb[0].mxu0 %v895
    %v966 = vpop.f32.mrb[0].mxu0
    %v967 = vadd.f32 0.0, %v966
    %v968 = vpop.f32.mrb[0].mxu0
    %v969 = vadd.f32 0.0, %v968
    %970 = vmatprep.mubr.f32.mxu0 0.0
    %971 = vmatmul.mubr.f32.gmra.mrb[0].mxu0 %v898
    %v972 = vpop.f32.mrb[0].mxu0
    %v973 = vadd.f32 0.0, %v972
    %v974 = vpop.f32.mrb[0].mxu0
    %v975 = vadd.f32 0.0, %v974
    %976 = vdwg.mxu0
    %s977 = scalar_lea.vmem %s4, 216
    %v978 = vld [vmem:[%s977] sm:$0xf]
    %v979 = vld [vmem:[%s977 + $0x4] sm:$0xf]
    %v980 = vld [vmem:[%s977 + $0x8] sm:$0xf]
    %v981 = vld [vmem:[%s977 + $0xc] sm:$0xf]
    %v982 = vld [vmem:[%s977 + $0x10] sm:$0xf]
    %v983 = vld [vmem:[%s977 + $0x14] sm:$0xf]
    %v984 = vld [vmem:[%s977 + $0x18] sm:$0xf]
    %v985 = vld [vmem:[%s977 + $0x1c] sm:$0xf]
    %v986 = vld [vmem:[%s977 + $0x20] sm:$0xf]
    %v987 = vld [vmem:[%s977 + $0x24] sm:$0xf]
    %v988 = vld [vmem:[%s977 + $0x28] sm:$0xf]
    %v989 = vld [vmem:[%s977 + $0x2c] sm:$0xf]
    %v990 = vld [vmem:[%s977 + $0x30] sm:$0xf]
    %v991 = vld [vmem:[%s977 + $0x34] sm:$0xf]
    %v992 = vld [vmem:[%s977 + $0x38] sm:$0xf]
    %v993 = vld [vmem:[%s977 + $0x3c] sm:$0xf]
    %v994 = vld [vmem:[%s977 + $0x40] sm:$0xf]
    %v995 = vld [vmem:[%s977 + $0x44] sm:$0xf]
    %v996 = vpack.c.bf16 %v973, %v967
    %v997 = vpack.c.bf16 %v975, %v969
    %v1016 = vunpack.c.l.b16 %v978
    %v1017 = vunpack.c.l.b16 %v979
    %v1018 = vunpack.c.l.b16 %v980
    %v1019 = vunpack.c.l.b16 %v981
    %v1020 = vunpack.c.l.b16 %v982
    %v1021 = vunpack.c.l.b16 %v983
    %v1022 = vunpack.c.l.b16 %v984
    %v1023 = vunpack.c.l.b16 %v985
    %v1024 = vunpack.c.l.b16 %v986
    %v1025 = vunpack.c.l.b16 %v987
    %v1026 = vunpack.c.l.b16 %v988
    %v1027 = vunpack.c.l.b16 %v989
    %v1028 = vunpack.c.l.b16 %v990
    %v1029 = vunpack.c.l.b16 %v991
    %v1030 = vunpack.c.l.b16 %v992
    %v1031 = vunpack.c.l.b16 %v993
    %v1032 = vunpack.c.l.b16 %v994
    %v1033 = vunpack.c.l.b16 %v995
    %v1034 = vpack.c.b16 %v1017, %v1016
    %v1035 = vpack.c.b16 %v1019, %v1018
    %v1036 = vpack.c.b16 %v1021, %v1020
    %v1037 = vpack.c.b16 %v1023, %v1022
    %v1038 = vpack.c.b16 %v1025, %v1024
    %v1039 = vpack.c.b16 %v1027, %v1026
    %v1040 = vpack.c.b16 %v1029, %v1028
    %v1041 = vpack.c.b16 %v1031, %v1030
    %v1042 = vpack.c.b16 %v1033, %v1032
    %v1053 = vsel %vm541, %v997, 0
    %1055 = vmatprep.subr.bf16.mxu0 0
    %1056 = vmatpush1.bf16.msra.mxu0 %v1034
    %1057 = vmatprep.subr.bf16.mxu0 0
    %1058 = vmatpush1.bf16.msra.mxu0 %v1035
    %1059 = vmatprep.subr.bf16.mxu0 0
    %1060 = vmatpush1.bf16.msra.mxu0 %v1036
    %1061 = vmatprep.subr.bf16.mxu0 0
    %1062 = vmatpush1.bf16.msra.mxu0 %v1037
    %1063 = vmatprep.subr.bf16.mxu0 0
    %1064 = vmatpush1.bf16.msra.mxu0 %v1038
    %1065 = vmatprep.subr.bf16.mxu0 0
    %1066 = vmatpush1.bf16.msra.mxu0 %v1039
    %1067 = vmatprep.subr.bf16.mxu0 0
    %1068 = vmatpush1.bf16.msra.mxu0 %v1040
    %1069 = vmatprep.subr.bf16.mxu0 0
    %1070 = vmatpush1.bf16.msra.mxu0 %v1041
    %1071 = vmatprep.subr.bf16.mxu0 0
    %1072 = vmatpush1.bf16.msra.mxu0 %v1042
    %1073 = vmatprep.subr.bf16.mxu0 0
    %1074 = vmatpush1.bf16.msra.mxu0 0
    %1075 = vmatprep.subr.bf16.mxu0 0
    %1076 = vmatpush1.bf16.msra.mxu0 0
    %1077 = vmatprep.subr.bf16.mxu0 0
    %1078 = vmatpush1.bf16.msra.mxu0 0
    %1079 = vmatprep.subr.bf16.mxu0 0
    %1080 = vmatpush1.bf16.msra.mxu0 0
    %1081 = vmatprep.subr.bf16.mxu0 0
    %1082 = vmatpush1.bf16.msra.mxu0 0
    %1083 = vmatprep.subr.bf16.mxu0 0
    %1084 = vmatpush1.bf16.msra.mxu0 0
    %1085 = vmatprep.subr.bf16.mxu0 0
    %1086 = vmatpush1.bf16.msra.mxu0 0
    %1087 = vmatprep.mubr.bf16.mxu0 %v1053
    %1088 = vmatmul.mubr.bf16.gmra.mrb[0].mxu0 %v996
    %v1089 = vpop.f32.mrb[0].mxu0
    %v1090 = vadd.f32 0.0, %v1089
    %v1091 = vpop.f32.mrb[0].mxu0
    %v1092 = vpop.f32.mrb[0].mxu0
    %v1093 = vadd.f32 0.0, %v1092
    %v1094 = vpop.f32.mrb[0].mxu0
    %1095 = vdwg.mxu0
    %v1096 = vadd.f32 %v889, %v1090
    %v1097 = vadd.f32 %v890, %v1093
    %s1098 = scalar_lea.vmem %s3, 64
    %v1099 = vld [vmem:[%s1098] sm:$0xff]
    %v1100 = vld [vmem:[%s1098 + $0x8] sm:$0xff]
    %v1102 = vsel %vm276, %v1099, 0
    %v1105 = vsel %vm276, %v1100, 0
    %1107 = vmatprep.subr.mxu0 %v263
    %1108 = vmatpush1.msra.mxu0 %v262
    %1109 = vmatprep.subr.mxu0 %v265
    %1110 = vmatpush1.msra.mxu0 %v264
    %1111 = vmatprep.subr.mxu0 %v267
    %1112 = vmatpush1.msra.mxu0 %v266
    %1113 = vmatprep.subr.mxu0 %v269
    %1114 = vmatpush1.msra.mxu0 %v268
    %1115 = vmatprep.subr.mxu0 %v271
    %1116 = vmatpush1.msra.mxu0 %v270
    %1117 = vmatprep.subr.mxu0 %v273
    %1118 = vmatpush1.msra.mxu0 %v272
    %1119 = vmatprep.subr.mxu0 0.0
    %1120 = vmatpush1.msra.mxu0 0.0
    %1121 = vmatprep.subr.mxu0 0.0
    %1122 = vmatpush1.msra.mxu0 0.0
    %1123 = vmatprep.subr.mxu0 0.0
    %1124 = vmatpush1.msra.mxu0 0.0
    %1125 = vmatprep.subr.mxu0 0.0
    %1126 = vmatpush1.msra.mxu0 0.0
    %1127 = vmatprep.subr.mxu0 0.0
    %1128 = vmatpush1.msra.mxu0 0.0
    %1129 = vmatprep.subr.mxu0 0.0
    %1130 = vmatpush1.msra.mxu0 0.0
    %1131 = vmatprep.subr.mxu0 0.0
    %1132 = vmatpush1.msra.mxu0 0.0
    %1133 = vmatprep.subr.mxu0 0.0
    %1134 = vmatpush1.msra.mxu0 0.0
    %1135 = vmatprep.subr.mxu0 0.0
    %1136 = vmatpush1.msra.mxu0 0.0
    %1137 = vmatprep.subr.mxu0 0.0
    %1138 = vmatpush1.msra.mxu0 0.0
    %1139 = vmatprep.subr.mxu0 0.0
    %1140 = vmatpush1.msra.mxu0 0.0
    %1141 = vmatprep.subr.mxu0 0.0
    %1142 = vmatpush1.msra.mxu0 0.0
    %1143 = vmatprep.subr.mxu0 0.0
    %1144 = vmatpush1.msra.mxu0 0.0
    %1145 = vmatprep.subr.mxu0 0.0
    %1146 = vmatpush1.msra.mxu0 0.0
    %1147 = vmatprep.subr.mxu0 0.0
    %1148 = vmatpush1.msra.mxu0 0.0
    %1149 = vmatprep.subr.mxu0 0.0
    %1150 = vmatpush1.msra.mxu0 0.0
    %1151 = vmatprep.subr.mxu0 0.0
    %1152 = vmatpush1.msra.mxu0 0.0
    %1153 = vmatprep.subr.mxu0 0.0
    %1154 = vmatpush1.msra.mxu0 0.0
    %1155 = vmatprep.subr.mxu0 0.0
    %1156 = vmatpush1.msra.mxu0 0.0
    %1157 = vmatprep.subr.mxu0 0.0
    %1158 = vmatpush1.msra.mxu0 0.0
    %1159 = vmatprep.subr.mxu0 0.0
    %1160 = vmatpush1.msra.mxu0 0.0
    %1161 = vmatprep.subr.mxu0 0.0
    %1162 = vmatpush1.msra.mxu0 0.0
    %1163 = vmatprep.subr.mxu0 0.0
    %1164 = vmatpush1.msra.mxu0 0.0
    %1165 = vmatprep.subr.mxu0 0.0
    %1166 = vmatpush1.msra.mxu0 0.0
    %1167 = vmatprep.subr.mxu0 0.0
    %1168 = vmatpush1.msra.mxu0 0.0
    %1169 = vmatprep.subr.mxu0 0.0
    %1170 = vmatpush1.msra.mxu0 0.0
    %1171 = vmatprep.mubr.f32.mxu0 0.0
    %1172 = vmatmul.mubr.f32.gmra.mrb[0].mxu0 %v1102
    %v1173 = vpop.f32.mrb[0].mxu0
    %v1174 = vadd.f32 0.0, %v1173
    %v1175 = vpop.f32.mrb[0].mxu0
    %v1176 = vadd.f32 0.0, %v1175
    %1177 = vmatprep.mubr.f32.mxu0 0.0
    %1178 = vmatmul.mubr.f32.gmra.mrb[0].mxu0 %v1105
    %v1179 = vpop.f32.mrb[0].mxu0
    %v1180 = vadd.f32 0.0, %v1179
    %v1181 = vpop.f32.mrb[0].mxu0
    %v1182 = vadd.f32 0.0, %v1181
    %1183 = vdwg.mxu0
    %s1184 = scalar_lea.vmem %s4, 288
    %v1185 = vld [vmem:[%s1184] sm:$0xf]
    %v1186 = vld [vmem:[%s1184 + $0x4] sm:$0xf]
    %v1187 = vld [vmem:[%s1184 + $0x8] sm:$0xf]
    %v1188 = vld [vmem:[%s1184 + $0xc] sm:$0xf]
    %v1189 = vld [vmem:[%s1184 + $0x10] sm:$0xf]
    %v1190 = vld [vmem:[%s1184 + $0x14] sm:$0xf]
    %v1191 = vld [vmem:[%s1184 + $0x18] sm:$0xf]
    %v1192 = vld [vmem:[%s1184 + $0x1c] sm:$0xf]
    %v1193 = vld [vmem:[%s1184 + $0x20] sm:$0xf]
    %v1194 = vld [vmem:[%s1184 + $0x24] sm:$0xf]
    %v1195 = vld [vmem:[%s1184 + $0x28] sm:$0xf]
    %v1196 = vld [vmem:[%s1184 + $0x2c] sm:$0xf]
    %v1197 = vld [vmem:[%s1184 + $0x30] sm:$0xf]
    %v1198 = vld [vmem:[%s1184 + $0x34] sm:$0xf]
    %v1199 = vld [vmem:[%s1184 + $0x38] sm:$0xf]
    %v1200 = vld [vmem:[%s1184 + $0x3c] sm:$0xf]
    %v1201 = vld [vmem:[%s1184 + $0x40] sm:$0xf]
    %v1202 = vld [vmem:[%s1184 + $0x44] sm:$0xf]
    %v1203 = vpack.c.bf16 %v1180, %v1174
    %v1204 = vpack.c.bf16 %v1182, %v1176
    %v1223 = vunpack.c.l.b16 %v1185
    %v1224 = vunpack.c.l.b16 %v1186
    %v1225 = vunpack.c.l.b16 %v1187
    %v1226 = vunpack.c.l.b16 %v1188
    %v1227 = vunpack.c.l.b16 %v1189
    %v1228 = vunpack.c.l.b16 %v1190
    %v1229 = vunpack.c.l.b16 %v1191
    %v1230 = vunpack.c.l.b16 %v1192
    %v1231 = vunpack.c.l.b16 %v1193
    %v1232 = vunpack.c.l.b16 %v1194
    %v1233 = vunpack.c.l.b16 %v1195
    %v1234 = vunpack.c.l.b16 %v1196
    %v1235 = vunpack.c.l.b16 %v1197
    %v1236 = vunpack.c.l.b16 %v1198
    %v1237 = vunpack.c.l.b16 %v1199
    %v1238 = vunpack.c.l.b16 %v1200
    %v1239 = vunpack.c.l.b16 %v1201
    %v1240 = vunpack.c.l.b16 %v1202
    %v1241 = vpack.c.b16 %v1224, %v1223
    %v1242 = vpack.c.b16 %v1226, %v1225
    %v1243 = vpack.c.b16 %v1228, %v1227
    %v1244 = vpack.c.b16 %v1230, %v1229
    %v1245 = vpack.c.b16 %v1232, %v1231
    %v1246 = vpack.c.b16 %v1234, %v1233
    %v1247 = vpack.c.b16 %v1236, %v1235
    %v1248 = vpack.c.b16 %v1238, %v1237
    %v1249 = vpack.c.b16 %v1240, %v1239
    %v1260 = vsel %vm541, %v1204, 0
    %1262 = vmatprep.subr.bf16.mxu0 0
    %1263 = vmatpush1.bf16.msra.mxu0 %v1241
    %1264 = vmatprep.subr.bf16.mxu0 0
    %1265 = vmatpush1.bf16.msra.mxu0 %v1242
    %1266 = vmatprep.subr.bf16.mxu0 0
    %1267 = vmatpush1.bf16.msra.mxu0 %v1243
    %1268 = vmatprep.subr.bf16.mxu0 0
    %1269 = vmatpush1.bf16.msra.mxu0 %v1244
    %1270 = vmatprep.subr.bf16.mxu0 0
    %1271 = vmatpush1.bf16.msra.mxu0 %v1245
    %1272 = vmatprep.subr.bf16.mxu0 0
    %1273 = vmatpush1.bf16.msra.mxu0 %v1246
    %1274 = vmatprep.subr.bf16.mxu0 0
    %1275 = vmatpush1.bf16.msra.mxu0 %v1247
    %1276 = vmatprep.subr.bf16.mxu0 0
    %1277 = vmatpush1.bf16.msra.mxu0 %v1248
    %1278 = vmatprep.subr.bf16.mxu0 0
    %1279 = vmatpush1.bf16.msra.mxu0 %v1249
    %1280 = vmatprep.subr.bf16.mxu0 0
    %1281 = vmatpush1.bf16.msra.mxu0 0
    %1282 = vmatprep.subr.bf16.mxu0 0
    %1283 = vmatpush1.bf16.msra.mxu0 0
    %1284 = vmatprep.subr.bf16.mxu0 0
    %1285 = vmatpush1.bf16.msra.mxu0 0
    %1286 = vmatprep.subr.bf16.mxu0 0
    %1287 = vmatpush1.bf16.msra.mxu0 0
    %1288 = vmatprep.subr.bf16.mxu0 0
    %1289 = vmatpush1.bf16.msra.mxu0 0
    %1290 = vmatprep.subr.bf16.mxu0 0
    %1291 = vmatpush1.bf16.msra.mxu0 0
    %1292 = vmatprep.subr.bf16.mxu0 0
    %1293 = vmatpush1.bf16.msra.mxu0 0
    %1294 = vmatprep.mubr.bf16.mxu0 %v1260
    %1295 = vmatmul.mubr.bf16.gmra.mrb[0].mxu0 %v1203
    %v1296 = vpop.f32.mrb[0].mxu0
    %v1297 = vadd.f32 0.0, %v1296
    %v1298 = vpop.f32.mrb[0].mxu0
    %v1299 = vpop.f32.mrb[0].mxu0
    %v1300 = vadd.f32 0.0, %v1299
    %v1301 = vpop.f32.mrb[0].mxu0
    %1302 = vdwg.mxu0
    %v1303 = vadd.f32 %v1096, %v1297
    %v1304 = vadd.f32 %v1097, %v1300
    %v1305 = vld [vmem:[%s5] sm:$0x1]
    %v1307 = vlaneseq
    %v1308 = vshrl.u32 %v1307, 7
    %v1309 = vsub.s32 0, %v1308
    %v1310 = vrot.slane %v1305, %v1309
    %v1312 = vadd.f32 %v1303, %v1310
    %v1313 = vadd.f32 %v1304, %v1310
    %v1314 = vtanh.pop %v1312
    %v1315 = vtanh.pop %v1313
    %v1316 = vld [vmem:[%s6] sm:$0x3]
    %v1318 = vsel %vm541, %v1316, 0
    %1320 = vmatprep.subr.mxu0 0.0
    %1321 = vmatpush1.msra.mxu0 %v1314
    %1322 = vmatprep.subr.mxu0 0.0
    %1323 = vmatpush1.msra.mxu0 %v1315
    %1324 = vmatprep.subr.mxu0 0.0
    %1325 = vmatpush1.msra.mxu0 0.0
    %1326 = vmatprep.subr.mxu0 0.0
    %1327 = vmatpush1.msra.mxu0 0.0
    %1328 = vmatprep.subr.mxu0 0.0
    %1329 = vmatpush1.msra.mxu0 0.0
    %1330 = vmatprep.subr.mxu0 0.0
    %1331 = vmatpush1.msra.mxu0 0.0
    %1332 = vmatprep.subr.mxu0 0.0
    %1333 = vmatpush1.msra.mxu0 0.0
    %1334 = vmatprep.subr.mxu0 0.0
    %1335 = vmatpush1.msra.mxu0 0.0
    %1336 = vmatprep.subr.mxu0 0.0
    %1337 = vmatpush1.msra.mxu0 0.0
    %1338 = vmatprep.subr.mxu0 0.0
    %1339 = vmatpush1.msra.mxu0 0.0
    %1340 = vmatprep.subr.mxu0 0.0
    %1341 = vmatpush1.msra.mxu0 0.0
    %1342 = vmatprep.subr.mxu0 0.0
    %1343 = vmatpush1.msra.mxu0 0.0
    %1344 = vmatprep.subr.mxu0 0.0
    %1345 = vmatpush1.msra.mxu0 0.0
    %1346 = vmatprep.subr.mxu0 0.0
    %1347 = vmatpush1.msra.mxu0 0.0
    %1348 = vmatprep.subr.mxu0 0.0
    %1349 = vmatpush1.msra.mxu0 0.0
    %1350 = vmatprep.subr.mxu0 0.0
    %1351 = vmatpush1.msra.mxu0 0.0
    %1352 = vmatprep.subr.mxu0 0.0
    %1353 = vmatpush1.msra.mxu0 0.0
    %1354 = vmatprep.subr.mxu0 0.0
    %1355 = vmatpush1.msra.mxu0 0.0
    %1356 = vmatprep.subr.mxu0 0.0
    %1357 = vmatpush1.msra.mxu0 0.0
    %1358 = vmatprep.subr.mxu0 0.0
    %1359 = vmatpush1.msra.mxu0 0.0
    %1360 = vmatprep.subr.mxu0 0.0
    %1361 = vmatpush1.msra.mxu0 0.0
    %1362 = vmatprep.subr.mxu0 0.0
    %1363 = vmatpush1.msra.mxu0 0.0
    %1364 = vmatprep.subr.mxu0 0.0
    %1365 = vmatpush1.msra.mxu0 0.0
    %1366 = vmatprep.subr.mxu0 0.0
    %1367 = vmatpush1.msra.mxu0 0.0
    %1368 = vmatprep.subr.mxu0 0.0
    %1369 = vmatpush1.msra.mxu0 0.0
    %1370 = vmatprep.subr.mxu0 0.0
    %1371 = vmatpush1.msra.mxu0 0.0
    %1372 = vmatprep.subr.mxu0 0.0
    %1373 = vmatpush1.msra.mxu0 0.0
    %1374 = vmatprep.subr.mxu0 0.0
    %1375 = vmatpush1.msra.mxu0 0.0
    %1376 = vmatprep.subr.mxu0 0.0
    %1377 = vmatpush1.msra.mxu0 0.0
    %1378 = vmatprep.subr.mxu0 0.0
    %1379 = vmatpush1.msra.mxu0 0.0
    %1380 = vmatprep.subr.mxu0 0.0
    %1381 = vmatpush1.msra.mxu0 0.0
    %1382 = vmatprep.subr.mxu0 0.0
    %1383 = vmatpush1.msra.mxu0 0.0
    %1384 = vmatprep.mubr.f32.mxu0 0.0
    %1385 = vmatmul.mubr.f32.gmra.mrb[0].mxu0 %v1318
    %v1386 = vpop.f32.mrb[0].mxu0
    %v1387 = vadd.f32 0.0, %v1386
    %v1388 = vpop.f32.mrb[0].mxu0
    %1389 = vdwg.mxu0
    %v1390 = vld [vmem:[%s7] sm:$0xf]
    %v1391 = vld [vmem:[%s7 + $0x4] sm:$0xf]
    %v1392 = vld [vmem:[%s7 + $0x8] sm:$0xf]
    %v1393 = vld [vmem:[%s7 + $0xc] sm:$0xf]
    %v1394 = vld [vmem:[%s7 + $0x10] sm:$0xf]
    %v1395 = vld [vmem:[%s7 + $0x14] sm:$0xf]
    %v1396 = vld [vmem:[%s7 + $0x18] sm:$0xf]
    %v1397 = vld [vmem:[%s7 + $0x1c] sm:$0xf]
    %v1398 = vld [vmem:[%s7 + $0x20] sm:$0xf]
    %v1399 = vld [vmem:[%s7 + $0x24] sm:$0xf]
    %v1400 = vld [vmem:[%s7 + $0x28] sm:$0xf]
    %v1401 = vld [vmem:[%s7 + $0x2c] sm:$0xf]
    %v1402 = vld [vmem:[%s7 + $0x30] sm:$0xf]
    %v1403 = vld [vmem:[%s7 + $0x34] sm:$0xf]
    %v1404 = vld [vmem:[%s7 + $0x38] sm:$0xf]
    %v1405 = vld [vmem:[%s7 + $0x3c] sm:$0xf]
    %v1406 = vpack.c.bf16 %v1387, %v1387
    %s1407 = scalar_lea.vmem %s6, 2
    %v1408 = vld [vmem:[%s1407] sm:$0x3]
    %v1410 = vsel %vm541, %v1408, 0
    %1412 = vmatprep.subr.mxu0 0.0
    %1413 = vmatpush1.msra.mxu0 %v1314
    %1414 = vmatprep.subr.mxu0 0.0
    %1415 = vmatpush1.msra.mxu0 %v1315
    %1416 = vmatprep.subr.mxu0 0.0
    %1417 = vmatpush1.msra.mxu0 0.0
    %1418 = vmatprep.subr.mxu0 0.0
    %1419 = vmatpush1.msra.mxu0 0.0
    %1420 = vmatprep.subr.mxu0 0.0
    %1421 = vmatpush1.msra.mxu0 0.0
    %1422 = vmatprep.subr.mxu0 0.0
    %1423 = vmatpush1.msra.mxu0 0.0
    %1424 = vmatprep.subr.mxu0 0.0
    %1425 = vmatpush1.msra.mxu0 0.0
    %1426 = vmatprep.subr.mxu0 0.0
    %1427 = vmatpush1.msra.mxu0 0.0
    %1428 = vmatprep.subr.mxu0 0.0
    %1429 = vmatpush1.msra.mxu0 0.0
    %1430 = vmatprep.subr.mxu0 0.0
    %1431 = vmatpush1.msra.mxu0 0.0
    %1432 = vmatprep.subr.mxu0 0.0
    %1433 = vmatpush1.msra.mxu0 0.0
    %1434 = vmatprep.subr.mxu0 0.0
    %1435 = vmatpush1.msra.mxu0 0.0
    %1436 = vmatprep.subr.mxu0 0.0
    %1437 = vmatpush1.msra.mxu0 0.0
    %1438 = vmatprep.subr.mxu0 0.0
    %1439 = vmatpush1.msra.mxu0 0.0
    %1440 = vmatprep.subr.mxu0 0.0
    %1441 = vmatpush1.msra.mxu0 0.0
    %1442 = vmatprep.subr.mxu0 0.0
    %1443 = vmatpush1.msra.mxu0 0.0
    %1444 = vmatprep.subr.mxu0 0.0
    %1445 = vmatpush1.msra.mxu0 0.0
    %1446 = vmatprep.subr.mxu0 0.0
    %1447 = vmatpush1.msra.mxu0 0.0
    %1448 = vmatprep.subr.mxu0 0.0
    %1449 = vmatpush1.msra.mxu0 0.0
    %1450 = vmatprep.subr.mxu0 0.0
    %1451 = vmatpush1.msra.mxu0 0.0
    %1452 = vmatprep.subr.mxu0 0.0
    %1453 = vmatpush1.msra.mxu0 0.0
    %1454 = vmatprep.subr.mxu0 0.0
    %1455 = vmatpush1.msra.mxu0 0.0
    %1456 = vmatprep.subr.mxu0 0.0
    %1457 = vmatpush1.msra.mxu0 0.0
    %1458 = vmatprep.subr.mxu0 0.0
    %1459 = vmatpush1.msra.mxu0 0.0
    %1460 = vmatprep.subr.mxu0 0.0
    %1461 = vmatpush1.msra.mxu0 0.0
    %1462 = vmatprep.subr.mxu0 0.0
    %1463 = vmatpush1.msra.mxu0 0.0
    %1464 = vmatprep.subr.mxu0 0.0
    %1465 = vmatpush1.msra.mxu0 0.0
    %1466 = vmatprep.subr.mxu0 0.0
    %1467 = vmatpush1.msra.mxu0 0.0
    %1468 = vmatprep.subr.mxu0 0.0
    %1469 = vmatpush1.msra.mxu0 0.0
    %1470 = vmatprep.subr.mxu0 0.0
    %1471 = vmatpush1.msra.mxu0 0.0
    %1472 = vmatprep.subr.mxu0 0.0
    %1473 = vmatpush1.msra.mxu0 0.0
    %1474 = vmatprep.subr.mxu0 0.0
    %1475 = vmatpush1.msra.mxu0 0.0
    %1476 = vmatprep.mubr.f32.mxu0 0.0
    %1477 = vmatmul.mubr.f32.gmra.mrb[0].mxu0 %v1410
    %v1478 = vpop.f32.mrb[0].mxu0
    %v1479 = vadd.f32 0.0, %v1478
    %v1480 = vpop.f32.mrb[0].mxu0
    %1481 = vdwg.mxu0
    %s1482 = scalar_lea.vmem %s7, 64
    %v1483 = vld [vmem:[%s1482] sm:$0xf]
    %v1484 = vld [vmem:[%s1482 + $0x4] sm:$0xf]
    %v1485 = vld [vmem:[%s1482 + $0x8] sm:$0xf]
    %v1486 = vld [vmem:[%s1482 + $0xc] sm:$0xf]
    %v1487 = vld [vmem:[%s1482 + $0x10] sm:$0xf]
    %v1488 = vld [vmem:[%s1482 + $0x14] sm:$0xf]
    %v1489 = vld [vmem:[%s1482 + $0x18] sm:$0xf]
    %v1490 = vld [vmem:[%s1482 + $0x1c] sm:$0xf]
    %v1491 = vld [vmem:[%s1482 + $0x20] sm:$0xf]
    %v1492 = vld [vmem:[%s1482 + $0x24] sm:$0xf]
    %v1493 = vld [vmem:[%s1482 + $0x28] sm:$0xf]
    %v1494 = vld [vmem:[%s1482 + $0x2c] sm:$0xf]
    %v1495 = vld [vmem:[%s1482 + $0x30] sm:$0xf]
    %v1496 = vld [vmem:[%s1482 + $0x34] sm:$0xf]
    %v1497 = vld [vmem:[%s1482 + $0x38] sm:$0xf]
    %v1498 = vld [vmem:[%s1482 + $0x3c] sm:$0xf]
    %v1499 = vpack.c.bf16 %v1479, %v1479
    %v1516 = vunpack.c.l.b16 %v1483
    %v1517 = vunpack.c.l.b16 %v1484
    %v1518 = vunpack.c.l.b16 %v1485
    %v1519 = vunpack.c.l.b16 %v1486
    %v1520 = vunpack.c.l.b16 %v1487
    %v1521 = vunpack.c.l.b16 %v1488
    %v1522 = vunpack.c.l.b16 %v1489
    %v1523 = vunpack.c.l.b16 %v1490
    %v1524 = vunpack.c.l.b16 %v1491
    %v1525 = vunpack.c.l.b16 %v1492
    %v1526 = vunpack.c.l.b16 %v1493
    %v1527 = vunpack.c.l.b16 %v1494
    %v1528 = vunpack.c.l.b16 %v1495
    %v1529 = vunpack.c.l.b16 %v1496
    %v1530 = vunpack.c.l.b16 %v1497
    %v1531 = vunpack.c.l.b16 %v1498
    %v1532 = vpack.c.b16 %v1517, %v1516
    %v1533 = vpack.c.b16 %v1519, %v1518
    %v1534 = vpack.c.b16 %v1521, %v1520
    %v1535 = vpack.c.b16 %v1523, %v1522
    %v1536 = vpack.c.b16 %v1525, %v1524
    %v1537 = vpack.c.b16 %v1527, %v1526
    %v1538 = vpack.c.b16 %v1529, %v1528
    %v1539 = vpack.c.b16 %v1531, %v1530
    %1548 = vmatprep.subr.bf16.mxu0 0
    %1549 = vmatpush1.bf16.msra.mxu0 %v1532
    %1550 = vmatprep.subr.bf16.mxu0 0
    %1551 = vmatpush1.bf16.msra.mxu0 %v1533
    %1552 = vmatprep.subr.bf16.mxu0 0
    %1553 = vmatpush1.bf16.msra.mxu0 %v1534
    %1554 = vmatprep.subr.bf16.mxu0 0
    %1555 = vmatpush1.bf16.msra.mxu0 %v1535
    %1556 = vmatprep.subr.bf16.mxu0 0
    %1557 = vmatpush1.bf16.msra.mxu0 %v1536
    %1558 = vmatprep.subr.bf16.mxu0 0
    %1559 = vmatpush1.bf16.msra.mxu0 %v1537
    %1560 = vmatprep.subr.bf16.mxu0 0
    %1561 = vmatpush1.bf16.msra.mxu0 %v1538
    %1562 = vmatprep.subr.bf16.mxu0 0
    %1563 = vmatpush1.bf16.msra.mxu0 %v1539
    %1564 = vmatprep.subr.bf16.mxu0 0
    %1565 = vmatpush1.bf16.msra.mxu0 0
    %1566 = vmatprep.subr.bf16.mxu0 0
    %1567 = vmatpush1.bf16.msra.mxu0 0
    %1568 = vmatprep.subr.bf16.mxu0 0
    %1569 = vmatpush1.bf16.msra.mxu0 0
    %1570 = vmatprep.subr.bf16.mxu0 0
    %1571 = vmatpush1.bf16.msra.mxu0 0
    %1572 = vmatprep.subr.bf16.mxu0 0
    %1573 = vmatpush1.bf16.msra.mxu0 0
    %1574 = vmatprep.subr.bf16.mxu0 0
    %1575 = vmatpush1.bf16.msra.mxu0 0
    %1576 = vmatprep.subr.bf16.mxu0 0
    %1577 = vmatpush1.bf16.msra.mxu0 0
    %1578 = vmatprep.subr.bf16.mxu0 0
    %1579 = vmatpush1.bf16.msra.mxu0 0
    %1580 = vmatprep.mubr.bf16.mxu0 0
    %1581 = vmatmul.mubr.bf16.gmra.mrb[0].mxu0 %v1499
    %v1582 = vpop.f32.mrb[0].mxu0
    %v1583 = vadd.f32 0.0, %v1582
    %v1584 = vpop.f32.mrb[0].mxu0
    %v1585 = vpop.f32.mrb[0].mxu0
    %v1586 = vpop.f32.mrb[0].mxu0
    %1587 = vdwg.mxu0
    %v1604 = vunpack.c.l.b16 %v1390
    %v1605 = vunpack.c.l.b16 %v1391
    %v1606 = vunpack.c.l.b16 %v1392
    %v1607 = vunpack.c.l.b16 %v1393
    %v1608 = vunpack.c.l.b16 %v1394
    %v1609 = vunpack.c.l.b16 %v1395
    %v1610 = vunpack.c.l.b16 %v1396
    %v1611 = vunpack.c.l.b16 %v1397
    %v1612 = vunpack.c.l.b16 %v1398
    %v1613 = vunpack.c.l.b16 %v1399
    %v1614 = vunpack.c.l.b16 %v1400
    %v1615 = vunpack.c.l.b16 %v1401
    %v1616 = vunpack.c.l.b16 %v1402
    %v1617 = vunpack.c.l.b16 %v1403
    %v1618 = vunpack.c.l.b16 %v1404
    %v1619 = vunpack.c.l.b16 %v1405
    %v1620 = vpack.c.b16 %v1605, %v1604
    %v1621 = vpack.c.b16 %v1607, %v1606
    %v1622 = vpack.c.b16 %v1609, %v1608
    %v1623 = vpack.c.b16 %v1611, %v1610
    %v1624 = vpack.c.b16 %v1613, %v1612
    %v1625 = vpack.c.b16 %v1615, %v1614
    %v1626 = vpack.c.b16 %v1617, %v1616
    %v1627 = vpack.c.b16 %v1619, %v1618
    %1636 = vmatprep.subr.bf16.mxu0 0
    %1637 = vmatpush1.bf16.msra.mxu0 %v1620
    %1638 = vmatprep.subr.bf16.mxu0 0
    %1639 = vmatpush1.bf16.msra.mxu0 %v1621
    %1640 = vmatprep.subr.bf16.mxu0 0
    %1641 = vmatpush1.bf16.msra.mxu0 %v1622
    %1642 = vmatprep.subr.bf16.mxu0 0
    %1643 = vmatpush1.bf16.msra.mxu0 %v1623
    %1644 = vmatprep.subr.bf16.mxu0 0
    %1645 = vmatpush1.bf16.msra.mxu0 %v1624
    %1646 = vmatprep.subr.bf16.mxu0 0
    %1647 = vmatpush1.bf16.msra.mxu0 %v1625
    %1648 = vmatprep.subr.bf16.mxu0 0
    %1649 = vmatpush1.bf16.msra.mxu0 %v1626
    %1650 = vmatprep.subr.bf16.mxu0 0
    %1651 = vmatpush1.bf16.msra.mxu0 %v1627
    %1652 = vmatprep.subr.bf16.mxu0 0
    %1653 = vmatpush1.bf16.msra.mxu0 0
    %1654 = vmatprep.subr.bf16.mxu0 0
    %1655 = vmatpush1.bf16.msra.mxu0 0
    %1656 = vmatprep.subr.bf16.mxu0 0
    %1657 = vmatpush1.bf16.msra.mxu0 0
    %1658 = vmatprep.subr.bf16.mxu0 0
    %1659 = vmatpush1.bf16.msra.mxu0 0
    %1660 = vmatprep.subr.bf16.mxu0 0
    %1661 = vmatpush1.bf16.msra.mxu0 0
    %1662 = vmatprep.subr.bf16.mxu0 0
    %1663 = vmatpush1.bf16.msra.mxu0 0
    %1664 = vmatprep.subr.bf16.mxu0 0
    %1665 = vmatpush1.bf16.msra.mxu0 0
    %1666 = vmatprep.subr.bf16.mxu0 0
    %1667 = vmatpush1.bf16.msra.mxu0 0
    %1668 = vmatprep.mubr.bf16.mxu0 0
    %1669 = vmatmul.mubr.bf16.gmra.mrb[0].mxu0 %v1406
    %v1670 = vpop.f32.mrb[0].mxu0
    %v1671 = vadd.f32 %v1583, %v1670
    %v1672 = vpop.f32.mrb[0].mxu0
    %v1673 = vpop.f32.mrb[0].mxu0
    %v1674 = vpop.f32.mrb[0].mxu0
    %1675 = vdwg.mxu0
    %s1676 = scalar_lea.vmem %s6, 4
    %v1677 = vld [vmem:[%s1676] sm:$0x3]
    %v1679 = vsel %vm541, %v1677, 0
    %1681 = vmatprep.subr.mxu0 0.0
    %1682 = vmatpush1.msra.mxu0 %v1314
    %1683 = vmatprep.subr.mxu0 0.0
    %1684 = vmatpush1.msra.mxu0 %v1315
    %1685 = vmatprep.subr.mxu0 0.0
    %1686 = vmatpush1.msra.mxu0 0.0
    %1687 = vmatprep.subr.mxu0 0.0
    %1688 = vmatpush1.msra.mxu0 0.0
    %1689 = vmatprep.subr.mxu0 0.0
    %1690 = vmatpush1.msra.mxu0 0.0
    %1691 = vmatprep.subr.mxu0 0.0
    %1692 = vmatpush1.msra.mxu0 0.0
    %1693 = vmatprep.subr.mxu0 0.0
    %1694 = vmatpush1.msra.mxu0 0.0
    %1695 = vmatprep.subr.mxu0 0.0
    %1696 = vmatpush1.msra.mxu0 0.0
    %1697 = vmatprep.subr.mxu0 0.0
    %1698 = vmatpush1.msra.mxu0 0.0
    %1699 = vmatprep.subr.mxu0 0.0
    %1700 = vmatpush1.msra.mxu0 0.0
    %1701 = vmatprep.subr.mxu0 0.0
    %1702 = vmatpush1.msra.mxu0 0.0
    %1703 = vmatprep.subr.mxu0 0.0
    %1704 = vmatpush1.msra.mxu0 0.0
    %1705 = vmatprep.subr.mxu0 0.0
    %1706 = vmatpush1.msra.mxu0 0.0
    %1707 = vmatprep.subr.mxu0 0.0
    %1708 = vmatpush1.msra.mxu0 0.0
    %1709 = vmatprep.subr.mxu0 0.0
    %1710 = vmatpush1.msra.mxu0 0.0
    %1711 = vmatprep.subr.mxu0 0.0
    %1712 = vmatpush1.msra.mxu0 0.0
    %1713 = vmatprep.subr.mxu0 0.0
    %1714 = vmatpush1.msra.mxu0 0.0
    %1715 = vmatprep.subr.mxu0 0.0
    %1716 = vmatpush1.msra.mxu0 0.0
    %1717 = vmatprep.subr.mxu0 0.0
    %1718 = vmatpush1.msra.mxu0 0.0
    %1719 = vmatprep.subr.mxu0 0.0
    %1720 = vmatpush1.msra.mxu0 0.0
    %1721 = vmatprep.subr.mxu0 0.0
    %1722 = vmatpush1.msra.mxu0 0.0
    %1723 = vmatprep.subr.mxu0 0.0
    %1724 = vmatpush1.msra.mxu0 0.0
    %1725 = vmatprep.subr.mxu0 0.0
    %1726 = vmatpush1.msra.mxu0 0.0
    %1727 = vmatprep.subr.mxu0 0.0
    %1728 = vmatpush1.msra.mxu0 0.0
    %1729 = vmatprep.subr.mxu0 0.0
    %1730 = vmatpush1.msra.mxu0 0.0
    %1731 = vmatprep.subr.mxu0 0.0
    %1732 = vmatpush1.msra.mxu0 0.0
    %1733 = vmatprep.subr.mxu0 0.0
    %1734 = vmatpush1.msra.mxu0 0.0
    %1735 = vmatprep.subr.mxu0 0.0
    %1736 = vmatpush1.msra.mxu0 0.0
    %1737 = vmatprep.subr.mxu0 0.0
    %1738 = vmatpush1.msra.mxu0 0.0
    %1739 = vmatprep.subr.mxu0 0.0
    %1740 = vmatpush1.msra.mxu0 0.0
    %1741 = vmatprep.subr.mxu0 0.0
    %1742 = vmatpush1.msra.mxu0 0.0
    %1743 = vmatprep.subr.mxu0 0.0
    %1744 = vmatpush1.msra.mxu0 0.0
    %1745 = vmatprep.mubr.f32.mxu0 0.0
    %1746 = vmatmul.mubr.f32.gmra.mrb[0].mxu0 %v1679
    %v1747 = vpop.f32.mrb[0].mxu0
    %v1748 = vadd.f32 0.0, %v1747
    %v1749 = vpop.f32.mrb[0].mxu0
    %1750 = vdwg.mxu0
    %s1751 = scalar_lea.vmem %s7, 128
    %v1752 = vld [vmem:[%s1751] sm:$0xf]
    %v1753 = vld [vmem:[%s1751 + $0x4] sm:$0xf]
    %v1754 = vld [vmem:[%s1751 + $0x8] sm:$0xf]
    %v1755 = vld [vmem:[%s1751 + $0xc] sm:$0xf]
    %v1756 = vld [vmem:[%s1751 + $0x10] sm:$0xf]
    %v1757 = vld [vmem:[%s1751 + $0x14] sm:$0xf]
    %v1758 = vld [vmem:[%s1751 + $0x18] sm:$0xf]
    %v1759 = vld [vmem:[%s1751 + $0x1c] sm:$0xf]
    %v1760 = vld [vmem:[%s1751 + $0x20] sm:$0xf]
    %v1761 = vld [vmem:[%s1751 + $0x24] sm:$0xf]
    %v1762 = vld [vmem:[%s1751 + $0x28] sm:$0xf]
    %v1763 = vld [vmem:[%s1751 + $0x2c] sm:$0xf]
    %v1764 = vld [vmem:[%s1751 + $0x30] sm:$0xf]
    %v1765 = vld [vmem:[%s1751 + $0x34] sm:$0xf]
    %v1766 = vld [vmem:[%s1751 + $0x38] sm:$0xf]
    %v1767 = vld [vmem:[%s1751 + $0x3c] sm:$0xf]
    %v1768 = vpack.c.bf16 %v1748, %v1748
    %v1785 = vunpack.c.l.b16 %v1752
    %v1786 = vunpack.c.l.b16 %v1753
    %v1787 = vunpack.c.l.b16 %v1754
    %v1788 = vunpack.c.l.b16 %v1755
    %v1789 = vunpack.c.l.b16 %v1756
    %v1790 = vunpack.c.l.b16 %v1757
    %v1791 = vunpack.c.l.b16 %v1758
    %v1792 = vunpack.c.l.b16 %v1759
    %v1793 = vunpack.c.l.b16 %v1760
    %v1794 = vunpack.c.l.b16 %v1761
    %v1795 = vunpack.c.l.b16 %v1762
    %v1796 = vunpack.c.l.b16 %v1763
    %v1797 = vunpack.c.l.b16 %v1764
    %v1798 = vunpack.c.l.b16 %v1765
    %v1799 = vunpack.c.l.b16 %v1766
    %v1800 = vunpack.c.l.b16 %v1767
    %v1801 = vpack.c.b16 %v1786, %v1785
    %v1802 = vpack.c.b16 %v1788, %v1787
    %v1803 = vpack.c.b16 %v1790, %v1789
    %v1804 = vpack.c.b16 %v1792, %v1791
    %v1805 = vpack.c.b16 %v1794, %v1793
    %v1806 = vpack.c.b16 %v1796, %v1795
    %v1807 = vpack.c.b16 %v1798, %v1797
    %v1808 = vpack.c.b16 %v1800, %v1799
    %1817 = vmatprep.subr.bf16.mxu0 0
    %1818 = vmatpush1.bf16.msra.mxu0 %v1801
    %1819 = vmatprep.subr.bf16.mxu0 0
    %1820 = vmatpush1.bf16.msra.mxu0 %v1802
    %1821 = vmatprep.subr.bf16.mxu0 0
    %1822 = vmatpush1.bf16.msra.mxu0 %v1803
    %1823 = vmatprep.subr.bf16.mxu0 0
    %1824 = vmatpush1.bf16.msra.mxu0 %v1804
    %1825 = vmatprep.subr.bf16.mxu0 0
    %1826 = vmatpush1.bf16.msra.mxu0 %v1805
    %1827 = vmatprep.subr.bf16.mxu0 0
    %1828 = vmatpush1.bf16.msra.mxu0 %v1806
    %1829 = vmatprep.subr.bf16.mxu0 0
    %1830 = vmatpush1.bf16.msra.mxu0 %v1807
    %1831 = vmatprep.subr.bf16.mxu0 0
    %1832 = vmatpush1.bf16.msra.mxu0 %v1808
    %1833 = vmatprep.subr.bf16.mxu0 0
    %1834 = vmatpush1.bf16.msra.mxu0 0
    %1835 = vmatprep.subr.bf16.mxu0 0
    %1836 = vmatpush1.bf16.msra.mxu0 0
    %1837 = vmatprep.subr.bf16.mxu0 0
    %1838 = vmatpush1.bf16.msra.mxu0 0
    %1839 = vmatprep.subr.bf16.mxu0 0
    %1840 = vmatpush1.bf16.msra.mxu0 0
    %1841 = vmatprep.subr.bf16.mxu0 0
    %1842 = vmatpush1.bf16.msra.mxu0 0
    %1843 = vmatprep.subr.bf16.mxu0 0
    %1844 = vmatpush1.bf16.msra.mxu0 0
    %1845 = vmatprep.subr.bf16.mxu0 0
    %1846 = vmatpush1.bf16.msra.mxu0 0
    %1847 = vmatprep.subr.bf16.mxu0 0
    %1848 = vmatpush1.bf16.msra.mxu0 0
    %1849 = vmatprep.mubr.bf16.mxu0 0
    %1850 = vmatmul.mubr.bf16.gmra.mrb[0].mxu0 %v1768
    %v1851 = vpop.f32.mrb[0].mxu0
    %v1852 = vadd.f32 0.0, %v1851
    %v1853 = vpop.f32.mrb[0].mxu0
    %v1854 = vpop.f32.mrb[0].mxu0
    %v1855 = vpop.f32.mrb[0].mxu0
    %1856 = vdwg.mxu0
    %v1857 = vadd.f32 %v1671, %v1852
    %s1858 = scalar_lea.vmem %s6, 6
    %v1859 = vld [vmem:[%s1858] sm:$0x3]
    %v1861 = vsel %vm541, %v1859, 0
    %1863 = vmatprep.subr.mxu0 0.0
    %1864 = vmatpush1.msra.mxu0 %v1314
    %1865 = vmatprep.subr.mxu0 0.0
    %1866 = vmatpush1.msra.mxu0 %v1315
    %1867 = vmatprep.subr.mxu0 0.0
    %1868 = vmatpush1.msra.mxu0 0.0
    %1869 = vmatprep.subr.mxu0 0.0
    %1870 = vmatpush1.msra.mxu0 0.0
    %1871 = vmatprep.subr.mxu0 0.0
    %1872 = vmatpush1.msra.mxu0 0.0
    %1873 = vmatprep.subr.mxu0 0.0
    %1874 = vmatpush1.msra.mxu0 0.0
    %1875 = vmatprep.subr.mxu0 0.0
    %1876 = vmatpush1.msra.mxu0 0.0
    %1877 = vmatprep.subr.mxu0 0.0
    %1878 = vmatpush1.msra.mxu0 0.0
    %1879 = vmatprep.subr.mxu0 0.0
    %1880 = vmatpush1.msra.mxu0 0.0
    %1881 = vmatprep.subr.mxu0 0.0
    %1882 = vmatpush1.msra.mxu0 0.0
    %1883 = vmatprep.subr.mxu0 0.0
    %1884 = vmatpush1.msra.mxu0 0.0
    %1885 = vmatprep.subr.mxu0 0.0
    %1886 = vmatpush1.msra.mxu0 0.0
    %1887 = vmatprep.subr.mxu0 0.0
    %1888 = vmatpush1.msra.mxu0 0.0
    %1889 = vmatprep.subr.mxu0 0.0
    %1890 = vmatpush1.msra.mxu0 0.0
    %1891 = vmatprep.subr.mxu0 0.0
    %1892 = vmatpush1.msra.mxu0 0.0
    %1893 = vmatprep.subr.mxu0 0.0
    %1894 = vmatpush1.msra.mxu0 0.0
    %1895 = vmatprep.subr.mxu0 0.0
    %1896 = vmatpush1.msra.mxu0 0.0
    %1897 = vmatprep.subr.mxu0 0.0
    %1898 = vmatpush1.msra.mxu0 0.0
    %1899 = vmatprep.subr.mxu0 0.0
    %1900 = vmatpush1.msra.mxu0 0.0
    %1901 = vmatprep.subr.mxu0 0.0
    %1902 = vmatpush1.msra.mxu0 0.0
    %1903 = vmatprep.subr.mxu0 0.0
    %1904 = vmatpush1.msra.mxu0 0.0
    %1905 = vmatprep.subr.mxu0 0.0
    %1906 = vmatpush1.msra.mxu0 0.0
    %1907 = vmatprep.subr.mxu0 0.0
    %1908 = vmatpush1.msra.mxu0 0.0
    %1909 = vmatprep.subr.mxu0 0.0
    %1910 = vmatpush1.msra.mxu0 0.0
    %1911 = vmatprep.subr.mxu0 0.0
    %1912 = vmatpush1.msra.mxu0 0.0
    %1913 = vmatprep.subr.mxu0 0.0
    %1914 = vmatpush1.msra.mxu0 0.0
    %1915 = vmatprep.subr.mxu0 0.0
    %1916 = vmatpush1.msra.mxu0 0.0
    %1917 = vmatprep.subr.mxu0 0.0
    %1918 = vmatpush1.msra.mxu0 0.0
    %1919 = vmatprep.subr.mxu0 0.0
    %1920 = vmatpush1.msra.mxu0 0.0
    %1921 = vmatprep.subr.mxu0 0.0
    %1922 = vmatpush1.msra.mxu0 0.0
    %1923 = vmatprep.subr.mxu0 0.0
    %1924 = vmatpush1.msra.mxu0 0.0
    %1925 = vmatprep.subr.mxu0 0.0
    %1926 = vmatpush1.msra.mxu0 0.0
    %1927 = vmatprep.mubr.f32.mxu0 0.0
    %1928 = vmatmul.mubr.f32.gmra.mrb[0].mxu0 %v1861
    %v1929 = vpop.f32.mrb[0].mxu0
    %v1930 = vadd.f32 0.0, %v1929
    %v1931 = vpop.f32.mrb[0].mxu0
    %1932 = vdwg.mxu0
    %s1933 = scalar_lea.vmem %s7, 192
    %v1934 = vld [vmem:[%s1933] sm:$0xf]
    %v1935 = vld [vmem:[%s1933 + $0x4] sm:$0xf]
    %v1936 = vld [vmem:[%s1933 + $0x8] sm:$0xf]
    %v1937 = vld [vmem:[%s1933 + $0xc] sm:$0xf]
    %v1938 = vld [vmem:[%s1933 + $0x10] sm:$0xf]
    %v1939 = vld [vmem:[%s1933 + $0x14] sm:$0xf]
    %v1940 = vld [vmem:[%s1933 + $0x18] sm:$0xf]
    %v1941 = vld [vmem:[%s1933 + $0x1c] sm:$0xf]
    %v1942 = vld [vmem:[%s1933 + $0x20] sm:$0xf]
    %v1943 = vld [vmem:[%s1933 + $0x24] sm:$0xf]
    %v1944 = vld [vmem:[%s1933 + $0x28] sm:$0xf]
    %v1945 = vld [vmem:[%s1933 + $0x2c] sm:$0xf]
    %v1946 = vld [vmem:[%s1933 + $0x30] sm:$0xf]
    %v1947 = vld [vmem:[%s1933 + $0x34] sm:$0xf]
    %v1948 = vld [vmem:[%s1933 + $0x38] sm:$0xf]
    %v1949 = vld [vmem:[%s1933 + $0x3c] sm:$0xf]
    %v1950 = vpack.c.bf16 %v1930, %v1930
    %v1967 = vunpack.c.l.b16 %v1934
    %v1968 = vunpack.c.l.b16 %v1935
    %v1969 = vunpack.c.l.b16 %v1936
    %v1970 = vunpack.c.l.b16 %v1937
    %v1971 = vunpack.c.l.b16 %v1938
    %v1972 = vunpack.c.l.b16 %v1939
    %v1973 = vunpack.c.l.b16 %v1940
    %v1974 = vunpack.c.l.b16 %v1941
    %v1975 = vunpack.c.l.b16 %v1942
    %v1976 = vunpack.c.l.b16 %v1943
    %v1977 = vunpack.c.l.b16 %v1944
    %v1978 = vunpack.c.l.b16 %v1945
    %v1979 = vunpack.c.l.b16 %v1946
    %v1980 = vunpack.c.l.b16 %v1947
    %v1981 = vunpack.c.l.b16 %v1948
    %v1982 = vunpack.c.l.b16 %v1949
    %v1983 = vpack.c.b16 %v1968, %v1967
    %v1984 = vpack.c.b16 %v1970, %v1969
    %v1985 = vpack.c.b16 %v1972, %v1971
    %v1986 = vpack.c.b16 %v1974, %v1973
    %v1987 = vpack.c.b16 %v1976, %v1975
    %v1988 = vpack.c.b16 %v1978, %v1977
    %v1989 = vpack.c.b16 %v1980, %v1979
    %v1990 = vpack.c.b16 %v1982, %v1981
    %1999 = vmatprep.subr.bf16.mxu0 0
    %2000 = vmatpush1.bf16.msra.mxu0 %v1983
    %2001 = vmatprep.subr.bf16.mxu0 0
    %2002 = vmatpush1.bf16.msra.mxu0 %v1984
    %2003 = vmatprep.subr.bf16.mxu0 0
    %2004 = vmatpush1.bf16.msra.mxu0 %v1985
    %2005 = vmatprep.subr.bf16.mxu0 0
    %2006 = vmatpush1.bf16.msra.mxu0 %v1986
    %2007 = vmatprep.subr.bf16.mxu0 0
    %2008 = vmatpush1.bf16.msra.mxu0 %v1987
    %2009 = vmatprep.subr.bf16.mxu0 0
    %2010 = vmatpush1.bf16.msra.mxu0 %v1988
    %2011 = vmatprep.subr.bf16.mxu0 0
    %2012 = vmatpush1.bf16.msra.mxu0 %v1989
    %2013 = vmatprep.subr.bf16.mxu0 0
    %2014 = vmatpush1.bf16.msra.mxu0 %v1990
    %2015 = vmatprep.subr.bf16.mxu0 0
    %2016 = vmatpush1.bf16.msra.mxu0 0
    %2017 = vmatprep.subr.bf16.mxu0 0
    %2018 = vmatpush1.bf16.msra.mxu0 0
    %2019 = vmatprep.subr.bf16.mxu0 0
    %2020 = vmatpush1.bf16.msra.mxu0 0
    %2021 = vmatprep.subr.bf16.mxu0 0
    %2022 = vmatpush1.bf16.msra.mxu0 0
    %2023 = vmatprep.subr.bf16.mxu0 0
    %2024 = vmatpush1.bf16.msra.mxu0 0
    %2025 = vmatprep.subr.bf16.mxu0 0
    %2026 = vmatpush1.bf16.msra.mxu0 0
    %2027 = vmatprep.subr.bf16.mxu0 0
    %2028 = vmatpush1.bf16.msra.mxu0 0
    %2029 = vmatprep.subr.bf16.mxu0 0
    %2030 = vmatpush1.bf16.msra.mxu0 0
    %2031 = vmatprep.mubr.bf16.mxu0 0
    %2032 = vmatmul.mubr.bf16.gmra.mrb[0].mxu0 %v1950
    %v2033 = vpop.f32.mrb[0].mxu0
    %v2034 = vadd.f32 0.0, %v2033
    %v2035 = vpop.f32.mrb[0].mxu0
    %v2036 = vpop.f32.mrb[0].mxu0
    %v2037 = vpop.f32.mrb[0].mxu0
    %2038 = vdwg.mxu0
    %v2039 = vadd.f32 %v1857, %v2034
    %v2040 = vld [vmem:[%s8] sm:$0x1]
    %v2042 = vlaneseq
    %v2043 = vshrl.u32 %v2042, 7
    %v2044 = vsub.s32 0, %v2043
    %v2045 = vrot.slane %v2040, %v2044
    %v2047 = vadd.f32 %v2039, %v2045
    %v2048 = vtanh.pop %v2047
    %v2049 = vld [vmem:[%s9] sm:$0xf]
    %v2050 = vld [vmem:[%s9 + $0x4] sm:$0xf]
    %v2051 = vld [vmem:[%s9 + $0x8] sm:$0xf]
    %v2052 = vld [vmem:[%s9 + $0xc] sm:$0xf]
    %v2053 = vld [vmem:[%s9 + $0x10] sm:$0xf]
    %v2054 = vld [vmem:[%s9 + $0x14] sm:$0xf]
    %v2055 = vld [vmem:[%s9 + $0x18] sm:$0xf]
    %v2056 = vld [vmem:[%s9 + $0x1c] sm:$0xf]
    %v2057 = vld [vmem:[%s9 + $0x20] sm:$0xf]
    %v2058 = vld [vmem:[%s9 + $0x24] sm:$0xf]
    %v2059 = vld [vmem:[%s9 + $0x28] sm:$0xf]
    %v2060 = vld [vmem:[%s9 + $0x2c] sm:$0xf]
    %v2061 = vld [vmem:[%s9 + $0x30] sm:$0xf]
    %v2062 = vld [vmem:[%s9 + $0x34] sm:$0xf]
    %v2063 = vld [vmem:[%s9 + $0x38] sm:$0xf]
    %v2064 = vld [vmem:[%s9 + $0x3c] sm:$0xf]
    %v2065 = vpack.c.bf16 %v2048, %v2048
    %v2066 = vld [vmem:[%s10] sm:$0x1]
    %v2068 = vlaneseq
    %v2069 = vshrl.u32 %v2068, 7
    %v2070 = vsub.s32 0, %v2069
    %v2071 = vrot.slane %v2066, %v2070
    %v2089 = vunpack.c.l.b16 %v2049
    %v2090 = vunpack.c.l.b16 %v2050
    %v2091 = vunpack.c.l.b16 %v2051
    %v2092 = vunpack.c.l.b16 %v2052
    %v2093 = vunpack.c.l.b16 %v2053
    %v2094 = vunpack.c.l.b16 %v2054
    %v2095 = vunpack.c.l.b16 %v2055
    %v2096 = vunpack.c.l.b16 %v2056
    %v2097 = vunpack.c.l.b16 %v2057
    %v2098 = vunpack.c.l.b16 %v2058
    %v2099 = vunpack.c.l.b16 %v2059
    %v2100 = vunpack.c.l.b16 %v2060
    %v2101 = vunpack.c.l.b16 %v2061
    %v2102 = vunpack.c.l.b16 %v2062
    %v2103 = vunpack.c.l.b16 %v2063
    %v2104 = vunpack.c.l.b16 %v2064
    %v2105 = vpack.c.b16 %v2090, %v2089
    %v2106 = vpack.c.b16 %v2092, %v2091
    %v2107 = vpack.c.b16 %v2094, %v2093
    %v2108 = vpack.c.b16 %v2096, %v2095
    %v2109 = vpack.c.b16 %v2098, %v2097
    %v2110 = vpack.c.b16 %v2100, %v2099
    %v2111 = vpack.c.b16 %v2102, %v2101
    %v2112 = vpack.c.b16 %v2104, %v2103
    %2121 = vmatprep.subr.bf16.mxu0 0
    %2122 = vmatpush1.bf16.msra.mxu0 %v2105
    %2123 = vmatprep.subr.bf16.mxu0 0
    %2124 = vmatpush1.bf16.msra.mxu0 %v2106
    %2125 = vmatprep.subr.bf16.mxu0 0
    %2126 = vmatpush1.bf16.msra.mxu0 %v2107
    %2127 = vmatprep.subr.bf16.mxu0 0
    %2128 = vmatpush1.bf16.msra.mxu0 %v2108
    %2129 = vmatprep.subr.bf16.mxu0 0
    %2130 = vmatpush1.bf16.msra.mxu0 %v2109
    %2131 = vmatprep.subr.bf16.mxu0 0
    %2132 = vmatpush1.bf16.msra.mxu0 %v2110
    %2133 = vmatprep.subr.bf16.mxu0 0
    %2134 = vmatpush1.bf16.msra.mxu0 %v2111
    %2135 = vmatprep.subr.bf16.mxu0 0
    %2136 = vmatpush1.bf16.msra.mxu0 %v2112
    %2137 = vmatprep.subr.bf16.mxu0 0
    %2138 = vmatpush1.bf16.msra.mxu0 0
    %2139 = vmatprep.subr.bf16.mxu0 0
    %2140 = vmatpush1.bf16.msra.mxu0 0
    %2141 = vmatprep.subr.bf16.mxu0 0
    %2142 = vmatpush1.bf16.msra.mxu0 0
    %2143 = vmatprep.subr.bf16.mxu0 0
    %2144 = vmatpush1.bf16.msra.mxu0 0
    %2145 = vmatprep.subr.bf16.mxu0 0
    %2146 = vmatpush1.bf16.msra.mxu0 0
    %2147 = vmatprep.subr.bf16.mxu0 0
    %2148 = vmatpush1.bf16.msra.mxu0 0
    %2149 = vmatprep.subr.bf16.mxu0 0
    %2150 = vmatpush1.bf16.msra.mxu0 0
    %2151 = vmatprep.subr.bf16.mxu0 0
    %2152 = vmatpush1.bf16.msra.mxu0 0
    %2153 = vmatprep.mubr.bf16.mxu0 0
    %2154 = vmatmul.mubr.bf16.gmra.mrb[0].mxu0 %v2065
    %v2155 = vpop.f32.mrb[0].mxu0
    %v2156 = vadd.f32 %v2071, %v2155
    %v2157 = vpop.f32.mrb[0].mxu0
    %v2158 = vpop.f32.mrb[0].mxu0
    %v2159 = vpop.f32.mrb[0].mxu0
    %2160 = vdwg.mxu0
    %v2161 = vtanh.pop %v2156
    %v2162 = vld [vmem:[%s11] sm:$0xf]
    %v2163 = vld [vmem:[%s11 + $0x4] sm:$0xf]
    %v2164 = vld [vmem:[%s11 + $0x8] sm:$0xf]
    %v2165 = vld [vmem:[%s11 + $0xc] sm:$0xf]
    %v2166 = vld [vmem:[%s11 + $0x10] sm:$0xf]
    %v2167 = vld [vmem:[%s11 + $0x14] sm:$0xf]
    %v2168 = vld [vmem:[%s11 + $0x18] sm:$0xf]
    %v2169 = vld [vmem:[%s11 + $0x1c] sm:$0xf]
    %v2170 = vld [vmem:[%s11 + $0x20] sm:$0xf]
    %v2171 = vld [vmem:[%s11 + $0x24] sm:$0xf]
    %v2172 = vld [vmem:[%s11 + $0x28] sm:$0xf]
    %v2173 = vld [vmem:[%s11 + $0x2c] sm:$0xf]
    %v2174 = vld [vmem:[%s11 + $0x30] sm:$0xf]
    %v2175 = vld [vmem:[%s11 + $0x34] sm:$0xf]
    %v2176 = vld [vmem:[%s11 + $0x38] sm:$0xf]
    %v2177 = vld [vmem:[%s11 + $0x3c] sm:$0xf]
    %v2178 = vpack.c.bf16 %v2161, %v2161
    %v2179 = vld [vmem:[%s12] sm:$0x1]
    %v2181 = vlaneseq
    %v2182 = vshrl.u32 %v2181, 7
    %v2183 = vsub.s32 0, %v2182
    %v2184 = vrot.slane %v2179, %v2183
    %v2202 = vunpack.c.l.b16 %v2162
    %v2203 = vunpack.c.l.b16 %v2163
    %v2204 = vunpack.c.l.b16 %v2164
    %v2205 = vunpack.c.l.b16 %v2165
    %v2206 = vunpack.c.l.b16 %v2166
    %v2207 = vunpack.c.l.b16 %v2167
    %v2208 = vunpack.c.l.b16 %v2168
    %v2209 = vunpack.c.l.b16 %v2169
    %v2210 = vunpack.c.l.b16 %v2170
    %v2211 = vunpack.c.l.b16 %v2171
    %v2212 = vunpack.c.l.b16 %v2172
    %v2213 = vunpack.c.l.b16 %v2173
    %v2214 = vunpack.c.l.b16 %v2174
    %v2215 = vunpack.c.l.b16 %v2175
    %v2216 = vunpack.c.l.b16 %v2176
    %v2217 = vunpack.c.l.b16 %v2177
    %v2218 = vpack.c.b16 %v2203, %v2202
    %v2219 = vpack.c.b16 %v2205, %v2204
    %v2220 = vpack.c.b16 %v2207, %v2206
    %v2221 = vpack.c.b16 %v2209, %v2208
    %v2222 = vpack.c.b16 %v2211, %v2210
    %v2223 = vpack.c.b16 %v2213, %v2212
    %v2224 = vpack.c.b16 %v2215, %v2214
    %v2225 = vpack.c.b16 %v2217, %v2216
    %2234 = vmatprep.subr.bf16.mxu0 0
    %2235 = vmatpush1.bf16.msra.mxu0 %v2218
    %2236 = vmatprep.subr.bf16.mxu0 0
    %2237 = vmatpush1.bf16.msra.mxu0 %v2219
    %2238 = vmatprep.subr.bf16.mxu0 0
    %2239 = vmatpush1.bf16.msra.mxu0 %v2220
    %2240 = vmatprep.subr.bf16.mxu0 0
    %2241 = vmatpush1.bf16.msra.mxu0 %v2221
    %2242 = vmatprep.subr.bf16.mxu0 0
    %2243 = vmatpush1.bf16.msra.mxu0 %v2222
    %2244 = vmatprep.subr.bf16.mxu0 0
    %2245 = vmatpush1.bf16.msra.mxu0 %v2223
    %2246 = vmatprep.subr.bf16.mxu0 0
    %2247 = vmatpush1.bf16.msra.mxu0 %v2224
    %2248 = vmatprep.subr.bf16.mxu0 0
    %2249 = vmatpush1.bf16.msra.mxu0 %v2225
    %2250 = vmatprep.subr.bf16.mxu0 0
    %2251 = vmatpush1.bf16.msra.mxu0 0
    %2252 = vmatprep.subr.bf16.mxu0 0
    %2253 = vmatpush1.bf16.msra.mxu0 0
    %2254 = vmatprep.subr.bf16.mxu0 0
    %2255 = vmatpush1.bf16.msra.mxu0 0
    %2256 = vmatprep.subr.bf16.mxu0 0
    %2257 = vmatpush1.bf16.msra.mxu0 0
    %2258 = vmatprep.subr.bf16.mxu0 0
    %2259 = vmatpush1.bf16.msra.mxu0 0
    %2260 = vmatprep.subr.bf16.mxu0 0
    %2261 = vmatpush1.bf16.msra.mxu0 0
    %2262 = vmatprep.subr.bf16.mxu0 0
    %2263 = vmatpush1.bf16.msra.mxu0 0
    %2264 = vmatprep.subr.bf16.mxu0 0
    %2265 = vmatpush1.bf16.msra.mxu0 0
    %2266 = vmatprep.mubr.bf16.mxu0 0
    %2267 = vmatmul.mubr.bf16.gmra.mrb[0].mxu0 %v2178
    %v2268 = vpop.f32.mrb[0].mxu0
    %v2269 = vadd.f32 %v2184, %v2268
    %v2270 = vpop.f32.mrb[0].mxu0
    %v2271 = vpop.f32.mrb[0].mxu0
    %v2272 = vpop.f32.mrb[0].mxu0
    %2273 = vdwg.mxu0
    %2274 = vst [vmem:[#allocation2] sm:$0x3] %v2269
    // Predicated region
    $region54: #{lenet5_forward.1} parent=1 // pred_check
      _
    $region55: #{lenet5_forward.1} parent=1 // pred_check_branch
      %2276 = sbr.rel (0) target = $region57
    $region56: #{lenet5_forward.1} parent=1 // pred_region
      %s2278 = ssub.s32 32, 32
      %2279 = vsyncadd [#allocation3], %s2278
      %s2281 = sshll.u32 [#allocation2], 4
      %s2282 = int_to_ptr.vmem [resolvable:$true] %s2281
      %2284 = dma.vmem_to_hbm [thread:$0]  %s2282, 32, %s13, [#allocation3]
    $region57: #{lenet5_forward.1} parent=1 // pred_fallthru
      _
    // Predicated region
    $region58: #{lenet5_forward.1} parent=1 // pred_check
      _
    $region59: #{lenet5_forward.1} parent=1 // pred_check_branch
      %2286 = sbr.rel (0) target = $region61
    $region60: #{lenet5_forward.1} parent=1 // pred_region
      %2287 = dma.done [#allocation3], 32
    $region61: #{lenet5_forward.1} parent=1 // pred_fallthru
      _
    %2288 = vsyncpa [#allocation3], 1

</llo_original>
